<compile_context>
chip_gen: v7x
topology: tpu7x:2x2x1
jax: 0.10.0
libtpu: 0.0.40
codegen_flags: <defaults>
</compile_context>

<pallas_src>
import functools
import numpy as np
import jax
import jax.numpy as jnp
from jax.experimental import pallas as pl
from jax.experimental.pallas import tpu as pltpu

F32 = jnp.float32
BF16 = jnp.bfloat16
LANE = 128


def _vec_layout(inter_hid, hid, D, out_pad):
    """Static layout (name, lane-width) of the packed parameter-vector slab.
    Shared by prepare_params (packing) and the wrapper/kernel (static unpack)."""
    return [
        ('int_b1', inter_hid), ('int_b2', inter_hid),
        ('bn1_g', hid), ('bn1_b', hid), ('bn1_m', hid), ('bn1_v', hid), ('conv1_b', hid),
        ('bn2_g', hid), ('bn2_b', hid), ('bn2_m', hid), ('bn2_v', hid), ('conv2_b', hid),
        ('ff_b1', 2 * hid), ('ff_b2', hid),
        ('ln_g', hid), ('ln_b', hid),
        ('cbn_g', D), ('cbn_b', D), ('cbn_m', D), ('cbn_v', D),
        ('cls_b1', 2 * D), ('cls_b2', 2 * D), ('cls_b3', out_pad),
    ]


# ---------------------------------------------------------------------------
# Fused kernel: the entire forward pass, everything resident in VMEM.
# ---------------------------------------------------------------------------
def _fused_forward_kernel(
    # data
    bag_ref, emb_ref, adj_ref, gidr_ref, gidc_ref, gh_ref,
    # packed small parameter vectors
    vec_ref,
    # weight matrices
    intw_ref, c1w_ref, c2w_ref, qkvw_ref, wc_ref, fw1_ref, fw2_ref,
    w1_ref, w2_ref, w3_ref,
    # output
    out_ref,
    *, head, hid, num_graphs, vec_slices):

    def dot(a, b):
        return jnp.dot(a, b, preferred_element_type=jnp.float32)

    def relu(x):
        return jnp.maximum(x, 0.0)

    def bn_eval(x, g, b, m, v):                       # BatchNorm1d, eval mode
        return (x - m) * jax.lax.rsqrt(v + 1e-5) * g + b

    def layernorm(x, g, b):
        mu = jnp.mean(x, axis=1, keepdims=True)
        var = jnp.mean(jnp.square(x - mu), axis=1, keepdims=True)
        return (x - mu) * jax.lax.rsqrt(var + 1e-5) * g + b

    # -------- unpack the packed (rows,128) parameter slab (one DMA) ----------
    vec = {name: vec_ref[r:r + 1, :w] for (name, r, w) in vec_slices}

    # -------- inter_model: EmbeddingBag(sum)+ReLU, then 2x (Linear+ReLU) -----
    inter = relu(dot(bag_ref[...], emb_ref[...]))     # EmbeddingBag has no bias
    inter = relu(dot(inter, intw_ref[0]) + vec['int_b1'])
    inter = relu(dot(inter, intw_ref[1]) + vec['int_b2'])

    # -------- segment matrices rebuilt from node->graph ids (no B*N inputs) --
    B = num_graphs
    N = gidr_ref.shape[1]
    gid_r = gidr_ref[...]                             # (1, N) int32
    gid_c = gidc_ref[...]                             # (N, 1) int32
    seg = (jax.lax.broadcasted_iota(jnp.int32, (B, N), 0) == gid_r).astype(F32)    # (B,N)
    eq_nb = jax.lax.broadcasted_iota(jnp.int32, (N, B), 1) == gid_c                # (N,B)
    segT = eq_nb.astype(F32)
    neg = jnp.where(eq_nb, 0.0, -1e30)                # softmax mask; graphs must be non-empty

    counts = jnp.sum(seg, axis=1, keepdims=True)      # (B, 1) nodes per graph
    inv_counts = pl.reciprocal(counts, approx=True)   # EUP

    gh = gh_ref[...]
    init_avg_h = dot(seg, gh) * inv_counts            # dgl.mean_nodes (original h)

    # -------- GCN2: two GraphConv blocks, adjacency matmul in bf16 -----------
    adj = adj_ref[...]                                # (N, N) bf16

    def gcn_block(h, g, b, m, v, w, cb):
        hn = bn_eval(h, g, b, m, v)
        agg = dot(adj, hn.astype(adj.dtype))          # bf16 x bf16 -> f32 accumulate
        conv = dot(agg, w) + cb                       # GraphConv(norm='both') + bias
        return h + relu(conv)                         # residual; dropout = identity

    h = gcn_block(gh, vec['bn1_g'], vec['bn1_b'], vec['bn1_m'], vec['bn1_v'],
                  c1w_ref[...], vec['conv1_b'])
    h = gcn_block(h, vec['bn2_g'], vec['bn2_b'], vec['bn2_m'], vec['bn2_v'],
                  c2w_ref[...], vec['conv2_b'])

    inter_h = dot(segT, inter)                        # dgl.broadcast_nodes -> (N, ih)

    # -------- transformer_block: heads batched into wide matmuls -------------
    q = dot(h, qkvw_ref[0])                           # (N, head*hid)
    k = dot(inter_h, qkvw_ref[1])
    v = dot(h, qkvw_ref[2])
    scale = 1.0 / (1280.0 ** 0.5)                     # matches torch.sqrt(1280.)
    qk = (q * k) * scale

    # per-head score = lane-slice + reduce (XLU), keeping the MXU free
    att_cols = [jnp.sum(qk[:, i * hid:(i + 1) * hid], axis=1, keepdims=True)
                for i in range(head)]                 # head x (N, 1)

    # per-(head, graph) softmax over nodes in ONE pass: heads stacked on lanes
    masked = jnp.concatenate([c + neg for c in att_cols], axis=1)   # (N, head*B)
    gmax = jnp.max(masked, axis=0, keepdims=True)     # (1, head*B)
    e = jnp.exp(masked - gmax)                        # off-graph entries -> exactly 0
    gsum = jnp.sum(e, axis=0, keepdims=True)
    a = e * pl.reciprocal(gsum, approx=True)          # (N, head*B)

    mo_parts = []
    for i in range(head):
        alpha_i = jnp.sum(a[:, i * B:(i + 1) * B], axis=1, keepdims=True)  # (N,1)
        mo_parts.append(v[:, i * hid:(i + 1) * hid] * alpha_i)             # VPU broadcast
    mo = jnp.concatenate(mo_parts, axis=1)            # (N, head*hid)

    lg, lb = vec['ln_g'], vec['ln_b']                 # the SAME LayerNorm is reused twice
    x = dot(mo, wc_ref[...]) + h                      # concat_trans (no bias) + residual
    x = layernorm(x, lg, lb)
    y = dot(relu(dot(x, fw1_ref[...]) + vec['ff_b1']), fw2_ref[...]) + vec['ff_b2'] + x
    hg = layernorm(y, lg, lb)

    readout = dot(seg, hg)                            # dgl.sum_nodes -> (B, hid)

    # -------- classify head (eval BN + 3 linears) -----------------------------
    feat = jnp.concatenate([init_avg_h, readout], axis=1)   # (B, graph_size + hid)
    xc = bn_eval(feat, vec['cbn_g'], vec['cbn_b'], vec['cbn_m'], vec['cbn_v'])
    xc = relu(dot(xc, w1_ref[...]) + vec['cls_b1'])
    xc = relu(dot(xc, w2_ref[...]) + vec['cls_b2'])
    out_ref[...] = dot(xc, w3_ref[...]) + vec['cls_b3']      # lane-dense (B, 128) store


# ---------------------------------------------------------------------------
# Wrappers
# ---------------------------------------------------------------------------
def prepare_params(p, head, label_num):
    """Once-per-model preprocessing: pack all tiny (1,n) vectors into one
    (rows, 128) slab, stack per-head / same-shape weights, pad the final Linear
    to a lane-dense (multiple of 128) output."""
    hid = p['conv2_w'].shape[1]
    graph_size = p['conv1_w'].shape[0]
    inter_hid = p['emb'].shape[1]
    assert graph_size == hid, \
        "GCN2 residuals and the shared LayerNorm require graph_size == graph_hid"
    assert inter_hid == hid, \
        "transformer_block applies a (hid -> hid) K-projection to the broadcast inter features"
    D = graph_size + hid
    out_pad = ((label_num + LANE - 1) // LANE) * LANE

    def stack_heads(w):                               # (head, hid, hid) -> (hid, head*hid)
        return jnp.transpose(w, (1, 0, 2)).reshape(w.shape[1], head * hid)

    layout = _vec_layout(inter_hid, hid, D, out_pad)
    slab_cols = ((max(LANE, max(w for _, w in layout)) + LANE - 1) // LANE) * LANE
    slab = np.zeros((len(layout), slab_cols), np.float32)
    for r, (name, _) in enumerate(layout):
        val = np.asarray(p[name]).reshape(-1)
        slab[r, :val.shape[0]] = val                  # cls_b3 row is zero-padded to out_pad

    return {
        'emb': p['emb'],
        'int_w': jnp.stack([p['int_w1'], p['int_w2']]),
        'conv1_w': p['conv1_w'],
        'conv2_w': p['conv2_w'],
        'qkv_w': jnp.stack([stack_heads(p['wq']), stack_heads(p['wk']),
                            stack_heads(p['wv'])]),
        'wc': p['wc'],
        'ff_w1': p['ff_w1'],
        'ff_w2': p['ff_w2'],
        'cls_w1': p['cls_w1'],
        'cls_w2': p['cls_w2'],
        'cls_w3_pad': jnp.pad(p['cls_w3'], ((0, 0), (0, out_pad - label_num))),
        'vec_slab': jnp.asarray(slab),
    }


@functools.partial(jax.jit, static_argnames=('label_num',))
def combine_inter_model_forward(pp, bag_counts, adj_norm, seg_onehot, graph_h,
                                *, label_num):
    B, N = seg_onehot.shape
    hid = pp['conv2_w'].shape[1]
    graph_size = graph_h.shape[1]
    inter_hid = pp['emb'].shape[1]
    head = pp['qkv_w'].shape[2] // hid
    D = graph_size + hid
    out_pad = pp['cls_w3_pad'].shape[1]

    layout = _vec_layout(inter_hid, hid, D, out_pad)
    vec_slices = tuple((name, r, w) for r, (name, w) in enumerate(layout))

    # Only two N-length node->graph-id vectors go to the kernel (not B*N matrices).
    # In production these would be passed directly instead of derived from one-hot.
    gid = jnp.argmax(seg_onehot, axis=0).astype(jnp.int32)
    gid_row = gid[None, :]                            # (1, N)
    gid_col = gid[:, None]                            # (N, 1)

    # bf16 adjacency halves HBM bytes on the dominant (N x N) stream; the matmul
    # accumulates in f32.  TODO(synk): fp8 adjacency on v7x not implemented.
    adj_bf16 = adj_norm.astype(BF16)

    inputs = [
        bag_counts, pp['emb'], adj_bf16, gid_row, gid_col, graph_h,
        pp['vec_slab'],
        pp['int_w'], pp['conv1_w'], pp['conv2_w'], pp['qkv_w'], pp['wc'],
        pp['ff_w1'], pp['ff_w2'], pp['cls_w1'], pp['cls_w2'], pp['cls_w3_pad'],
    ]
    vmem = pl.BlockSpec(memory_space=pltpu.MemorySpace.VMEM)
    out = pl.pallas_call(
        functools.partial(_fused_forward_kernel, head=head, hid=hid,
                          num_graphs=B, vec_slices=vec_slices),
        out_shape=jax.ShapeDtypeStruct((B, out_pad), F32),
        in_specs=[vmem] * len(inputs),
        out_specs=vmem,
        compiler_params=pltpu.CompilerParams(vmem_limit_bytes=32 * 1024 * 1024),
    )(*inputs)
    return out[:, :label_num]


# ---------------------------------------------------------------------------
# Pure-JAX reference (f32, HIGHEST matmul precision) for numeric validation.
# ---------------------------------------------------------------------------
def reference_forward(p, bag_counts, adj_norm, seg_onehot, graph_h, head):
    hp = jax.lax.Precision.HIGHEST
    mm = lambda a, b: jnp.matmul(a, b, precision=hp)
    relu = lambda x: jnp.maximum(x, 0.0)

    def bn(x, g, b, m, v):
        return (x - m) / jnp.sqrt(v + 1e-5) * g + b

    def ln(x, g, b):
        mu = x.mean(axis=1, keepdims=True)
        var = ((x - mu) ** 2).mean(axis=1, keepdims=True)
        return (x - mu) / jnp.sqrt(var + 1e-5) * g + b

    inter = relu(mm(bag_counts, p['emb']))
    inter = relu(mm(inter, p['int_w1']) + p['int_b1'])
    inter = relu(mm(inter, p['int_w2']) + p['int_b2'])

    counts = seg_onehot.sum(axis=1, keepdims=True)
    init_avg_h = mm(seg_onehot / counts, graph_h)

    h = graph_h
    h = h + relu(mm(mm(adj_norm, bn(h, p['bn1_g'], p['bn1_b'], p['bn1_m'], p['bn1_v'])),
                    p['conv1_w']) + p['conv1_b'])
    h = h + relu(mm(mm(adj_norm, bn(h, p['bn2_g'], p['bn2_b'], p['bn2_m'], p['bn2_v'])),
                    p['conv2_w']) + p['conv2_b'])

    segT = seg_onehot.T
    inter_h = mm(segT, inter)
    outs = []
    for i in range(head):
        q = mm(h, p['wq'][i]); k = mm(inter_h, p['wk'][i]); v = mm(h, p['wv'][i])
        att = jnp.sum(q * k, axis=1, keepdims=True) / jnp.sqrt(1280.0)
        masked = jnp.where(segT > 0, att, -jnp.inf)
        gmax = jnp.max(masked, axis=0, keepdims=True)
        node_max = jnp.sum(segT * gmax, axis=1, keepdims=True)
        e = jnp.exp(att - node_max)
        gsum = jnp.sum(segT * e, axis=0, keepdims=True)
        node_sum = jnp.sum(segT * gsum, axis=1, keepdims=True)
        outs.append(v * (e / node_sum))
    mo = mm(jnp.concatenate(outs, axis=1), p['wc']) + h
    x = ln(mo, p['ln_g'], p['ln_b'])
    y = mm(relu(mm(x, p['ff_w1']) + p['ff_b1']), p['ff_w2']) + p['ff_b2'] + x
    hg = ln(y, p['ln_g'], p['ln_b'])
    readout = mm(seg_onehot, hg)

    feat = jnp.concatenate([init_avg_h, readout], axis=1)
    xc = bn(feat, p['cbn_g'], p['cbn_b'], p['cbn_m'], p['cbn_v'])
    xc = relu(mm(xc, p['cls_w1']) + p['cls_b1'])
    xc = relu(mm(xc, p['cls_w2']) + p['cls_b2'])
    return mm(xc, p['cls_w3']) + p['cls_b3']


# ---------------------------------------------------------------------------
if __name__ == "__main__":
    inter_size, inter_hid = 64, 32
    graph_size = graph_hid = 32        # GCN2 residual / LN require in_dim == hidden_dim
    label_num, head = 16, 2
    D = graph_size + graph_hid

    key = jax.random.PRNGKey(0)
    ks = iter(jax.random.split(key, 64))

    def nrm(shape, scale=0.1):
        return scale * jax.random.normal(next(ks), shape, F32)

    p = {
        # inter_model
        'emb': nrm((inter_size, inter_hid)),
        'int_w1': nrm((inter_hid, inter_hid)), 'int_b1': nrm((1, inter_hid)),
        'int_w2': nrm((inter_hid, inter_hid)), 'int_b2': nrm((1, inter_hid)),
        # GCN2 batch norms (eval-mode running statistics)
        'bn1_g': 1.0 + nrm((1, graph_hid)), 'bn1_b': nrm((1, graph_hid)),
        'bn1_m': nrm((1, graph_hid)), 'bn1_v': 1.0 + jnp.abs(nrm((1, graph_hid))),
        'bn2_g': 1.0 + nrm((1, graph_hid)), 'bn2_b': nrm((1, graph_hid)),
        'bn2_m': nrm((1, graph_hid)), 'bn2_v': 1.0 + jnp.abs(nrm((1, graph_hid))),
        # GraphConv weights
        'conv1_w': nrm((graph_size, graph_hid)), 'conv1_b': nrm((1, graph_hid)),
        'conv2_w': nrm((graph_hid, graph_hid)), 'conv2_b': nrm((1, graph_hid)),
        # transformer_block
        'wq': nrm((head, graph_hid, graph_hid)),
        'wk': nrm((head, graph_hid, graph_hid)),
        'wv': nrm((head, graph_hid, graph_hid)),
        'wc': nrm((head * graph_hid, graph_hid)),
        'ff_w1': nrm((graph_hid, 2 * graph_hid)), 'ff_b1': nrm((1, 2 * graph_hid)),
        'ff_w2': nrm((2 * graph_hid, graph_hid)), 'ff_b2': nrm((1, graph_hid)),
        'ln_g': 1.0 + nrm((1, graph_hid)), 'ln_b': nrm((1, graph_hid)),
        # classify head
        'cbn_g': 1.0 + nrm((1, D)), 'cbn_b': nrm((1, D)),
        'cbn_m': nrm((1, D)), 'cbn_v': 1.0 + jnp.abs(nrm((1, D))),
        'cls_w1': nrm((D, 2 * D)), 'cls_b1': nrm((1, 2 * D)),
        'cls_w2': nrm((2 * D, 2 * D)), 'cls_b2': nrm((1, 2 * D)),
        'cls_w3': nrm((2 * D, label_num)), 'cls_b3': nrm((1, label_num)),
    }

    # ---- batched graph: 2 graphs (5 and 3 nodes), ring topology each -------
    sizes = [5, 3]
    N = sum(sizes)
    A = np.zeros((N, N), np.float32)
    start = 0
    for s in sizes:
        for i in range(s):
            j = (i + 1) % s
            A[start + i, start + j] = 1.0
            A[start + j, start + i] = 1.0
        start += s
    deg = A.sum(axis=1)
    d_is = 1.0 / np.sqrt(deg)
    adj_norm = jnp.asarray(d_is[:, None] * A * d_is[None, :], F32)   # D^-1/2 A D^-1/2

    seg_np = np.zeros((len(sizes), N), np.float32)
    start = 0
    for b, s in enumerate(sizes):
        seg_np[b, start:start + s] = 1.0
        start += s
    seg_onehot = jnp.asarray(seg_np)

    # ---- EmbeddingBag(mode='sum', include_last_offset=True) inputs ---------
    # indices + offsets -> per-bag vocabulary count matrix (exact sum semantics)
    n_idx = 12
    offsets = np.array([0, 7, 12], np.int32)                  # len = n_graphs + 1
    indices = np.asarray(jax.random.randint(next(ks), (n_idx,), 0, inter_size))
    bag_counts_np = np.zeros((len(sizes), inter_size), np.float32)
    for b in range(len(sizes)):
        for t in indices[offsets[b]:offsets[b + 1]]:
            bag_counts_np[b, int(t)] += 1.0
    bag_counts = jnp.asarray(bag_counts_np)

    graph_h = nrm((N, graph_size), 1.0)

    pp = prepare_params(p, head=head, label_num=label_num)
    out = combine_inter_model_forward(pp, bag_counts, adj_norm, seg_onehot,
                                      graph_h, label_num=label_num)
    out = jax.block_until_ready(out)

    ref = reference_forward(p, bag_counts, adj_norm, seg_onehot, graph_h, head)
    assert out.shape == (len(sizes), label_num)
    assert bool(jnp.all(jnp.isfinite(out)))
    # Tolerance accounts for the intentional bf16 adjacency matmul (f32 accumulate)
    # and approx reciprocals; reference is f32 HIGHEST precision.
    err = float(jnp.max(jnp.abs(out - ref)))
    assert err < 5e-2, f"max |kernel - reference| = {err}"
    print("KERNEL_OK")
</pallas_src>

<mosaic_0001>
module attributes {stable_mosaic.version = 11 : i64} {
  func.func @_fused_forward_kernel(%arg0: memref<2x64xf32, #tpu.memory_space<vmem>>, %arg1: memref<64x32xf32, #tpu.memory_space<vmem>>, %arg2: memref<8x8xbf16, #tpu.memory_space<vmem>>, %arg3: memref<1x8xi32, #tpu.memory_space<vmem>>, %arg4: memref<8x1xi32, #tpu.memory_space<vmem>>, %arg5: memref<8x32xf32, #tpu.memory_space<vmem>>, %arg6: memref<23x128xf32, #tpu.memory_space<vmem>>, %arg7: memref<2x32x32xf32, #tpu.memory_space<vmem>>, %arg8: memref<32x32xf32, #tpu.memory_space<vmem>>, %arg9: memref<32x32xf32, #tpu.memory_space<vmem>>, %arg10: memref<3x32x64xf32, #tpu.memory_space<vmem>>, %arg11: memref<64x32xf32, #tpu.memory_space<vmem>>, %arg12: memref<32x64xf32, #tpu.memory_space<vmem>>, %arg13: memref<64x32xf32, #tpu.memory_space<vmem>>, %arg14: memref<64x128xf32, #tpu.memory_space<vmem>>, %arg15: memref<128x128xf32, #tpu.memory_space<vmem>>, %arg16: memref<128x128xf32, #tpu.memory_space<vmem>>, %arg17: memref<2x128xf32, #tpu.memory_space<vmem>>) attributes {dimension_semantics = [], scalar_prefetch = 0 : i64, scratch_operands = 0 : i64, tpu.core_type = #tpu.core_type<tc>} {
    %c0 = arith.constant 0 : index
    %c0_0 = arith.constant 0 : index
    %0 = vector.load %arg6[%c0, %c0_0] : memref<23x128xf32, #tpu.memory_space<vmem>>, vector<1x32xf32>
    %c1 = arith.constant 1 : index
    %c0_1 = arith.constant 0 : index
    %1 = vector.load %arg6[%c1, %c0_1] : memref<23x128xf32, #tpu.memory_space<vmem>>, vector<1x32xf32>
    %c2 = arith.constant 2 : index
    %c0_2 = arith.constant 0 : index
    %2 = vector.load %arg6[%c2, %c0_2] : memref<23x128xf32, #tpu.memory_space<vmem>>, vector<1x32xf32>
    %c3 = arith.constant 3 : index
    %c0_3 = arith.constant 0 : index
    %3 = vector.load %arg6[%c3, %c0_3] : memref<23x128xf32, #tpu.memory_space<vmem>>, vector<1x32xf32>
    %c4 = arith.constant 4 : index
    %c0_4 = arith.constant 0 : index
    %4 = vector.load %arg6[%c4, %c0_4] : memref<23x128xf32, #tpu.memory_space<vmem>>, vector<1x32xf32>
    %c5 = arith.constant 5 : index
    %c0_5 = arith.constant 0 : index
    %5 = vector.load %arg6[%c5, %c0_5] : memref<23x128xf32, #tpu.memory_space<vmem>>, vector<1x32xf32>
    %c6 = arith.constant 6 : index
    %c0_6 = arith.constant 0 : index
    %6 = vector.load %arg6[%c6, %c0_6] : memref<23x128xf32, #tpu.memory_space<vmem>>, vector<1x32xf32>
    %c7 = arith.constant 7 : index
    %c0_7 = arith.constant 0 : index
    %7 = vector.load %arg6[%c7, %c0_7] : memref<23x128xf32, #tpu.memory_space<vmem>>, vector<1x32xf32>
    %c8 = arith.constant 8 : index
    %c0_8 = arith.constant 0 : index
    %8 = vector.load %arg6[%c8, %c0_8] : memref<23x128xf32, #tpu.memory_space<vmem>>, vector<1x32xf32>
    %c9 = arith.constant 9 : index
    %c0_9 = arith.constant 0 : index
    %9 = vector.load %arg6[%c9, %c0_9] : memref<23x128xf32, #tpu.memory_space<vmem>>, vector<1x32xf32>
    %c10 = arith.constant 10 : index
    %c0_10 = arith.constant 0 : index
    %10 = vector.load %arg6[%c10, %c0_10] : memref<23x128xf32, #tpu.memory_space<vmem>>, vector<1x32xf32>
    %c11 = arith.constant 11 : index
    %c0_11 = arith.constant 0 : index
    %11 = vector.load %arg6[%c11, %c0_11] : memref<23x128xf32, #tpu.memory_space<vmem>>, vector<1x32xf32>
    %c12 = arith.constant 12 : index
    %c0_12 = arith.constant 0 : index
    %12 = vector.load %arg6[%c12, %c0_12] : memref<23x128xf32, #tpu.memory_space<vmem>>, vector<1x64xf32>
    %c13 = arith.constant 13 : index
    %c0_13 = arith.constant 0 : index
    %13 = vector.load %arg6[%c13, %c0_13] : memref<23x128xf32, #tpu.memory_space<vmem>>, vector<1x32xf32>
    %c14 = arith.constant 14 : index
    %c0_14 = arith.constant 0 : index
    %14 = vector.load %arg6[%c14, %c0_14] : memref<23x128xf32, #tpu.memory_space<vmem>>, vector<1x32xf32>
    %c15 = arith.constant 15 : index
    %c0_15 = arith.constant 0 : index
    %15 = vector.load %arg6[%c15, %c0_15] : memref<23x128xf32, #tpu.memory_space<vmem>>, vector<1x32xf32>
    %c16 = arith.constant 16 : index
    %c0_16 = arith.constant 0 : index
    %16 = vector.load %arg6[%c16, %c0_16] : memref<23x128xf32, #tpu.memory_space<vmem>>, vector<1x64xf32>
    %c17 = arith.constant 17 : index
    %c0_17 = arith.constant 0 : index
    %17 = vector.load %arg6[%c17, %c0_17] : memref<23x128xf32, #tpu.memory_space<vmem>>, vector<1x64xf32>
    %c18 = arith.constant 18 : index
    %c0_18 = arith.constant 0 : index
    %18 = vector.load %arg6[%c18, %c0_18] : memref<23x128xf32, #tpu.memory_space<vmem>>, vector<1x64xf32>
    %c19 = arith.constant 19 : index
    %c0_19 = arith.constant 0 : index
    %19 = vector.load %arg6[%c19, %c0_19] : memref<23x128xf32, #tpu.memory_space<vmem>>, vector<1x64xf32>
    %c20 = arith.constant 20 : index
    %c0_20 = arith.constant 0 : index
    %20 = vector.load %arg6[%c20, %c0_20] : memref<23x128xf32, #tpu.memory_space<vmem>>, vector<1x128xf32>
    %c21 = arith.constant 21 : index
    %c0_21 = arith.constant 0 : index
    %21 = vector.load %arg6[%c21, %c0_21] : memref<23x128xf32, #tpu.memory_space<vmem>>, vector<1x128xf32>
    %c22 = arith.constant 22 : index
    %c0_22 = arith.constant 0 : index
    %22 = vector.load %arg6[%c22, %c0_22] : memref<23x128xf32, #tpu.memory_space<vmem>>, vector<1x128xf32>
    %c0_23 = arith.constant 0 : index
    %c0_24 = arith.constant 0 : index
    %23 = vector.load %arg0[%c0_23, %c0_24] : memref<2x64xf32, #tpu.memory_space<vmem>>, vector<2x64xf32>
    %c0_25 = arith.constant 0 : index
    %c0_26 = arith.constant 0 : index
    %24 = vector.load %arg1[%c0_25, %c0_26] : memref<64x32xf32, #tpu.memory_space<vmem>>, vector<64x32xf32>
    %cst = arith.constant dense<0.000000e+00> : vector<2x32xf32>
    %25 = tpu.matmul %23, %24, %cst {dimension_numbers = #tpu.dot_dimension_numbers<[1], [0], [0], [1], [0, 0, 1, 1], [], []>} : vector<2x64xf32>, vector<64x32xf32>, vector<2x32xf32> -> vector<2x32xf32>
    %cst_27 = arith.constant 0.000000e+00 : f32
    %26 = vector.broadcast %cst_27 : f32 to vector<2x32xf32>
    %27 = arith.maximumf %25, %26 : vector<2x32xf32>
    %c0_28 = arith.constant 0 : index
    %c0_29 = arith.constant 0 : index
    %c0_30 = arith.constant 0 : index
    %28 = vector.load %arg7[%c0_28, %c0_29, %c0_30] : memref<2x32x32xf32, #tpu.memory_space<vmem>>, vector<1x32x32xf32>
    %29 = vector.shape_cast %28 : vector<1x32x32xf32> to vector<32x32xf32>
    %cst_31 = arith.constant dense<0.000000e+00> : vector<2x32xf32>
    %30 = tpu.matmul %27, %29, %cst_31 {dimension_numbers = #tpu.dot_dimension_numbers<[1], [0], [0], [1], [0, 0, 1, 1], [], []>} : vector<2x32xf32>, vector<32x32xf32>, vector<2x32xf32> -> vector<2x32xf32>
    %31 = vector.broadcast %0 : vector<1x32xf32> to vector<2x32xf32>
    %32 = arith.addf %30, %31 : vector<2x32xf32>
    %cst_32 = arith.constant 0.000000e+00 : f32
    %33 = vector.broadcast %cst_32 : f32 to vector<2x32xf32>
    %34 = arith.maximumf %32, %33 : vector<2x32xf32>
    %c1_33 = arith.constant 1 : index
    %c0_34 = arith.constant 0 : index
    %c0_35 = arith.constant 0 : index
    %35 = vector.load %arg7[%c1_33, %c0_34, %c0_35] : memref<2x32x32xf32, #tpu.memory_space<vmem>>, vector<1x32x32xf32>
    %36 = vector.shape_cast %35 : vector<1x32x32xf32> to vector<32x32xf32>
    %cst_36 = arith.constant dense<0.000000e+00> : vector<2x32xf32>
    %37 = tpu.matmul %34, %36, %cst_36 {dimension_numbers = #tpu.dot_dimension_numbers<[1], [0], [0], [1], [0, 0, 1, 1], [], []>} : vector<2x32xf32>, vector<32x32xf32>, vector<2x32xf32> -> vector<2x32xf32>
    %38 = vector.broadcast %1 : vector<1x32xf32> to vector<2x32xf32>
    %39 = arith.addf %37, %38 : vector<2x32xf32>
    %cst_37 = arith.constant 0.000000e+00 : f32
    %40 = vector.broadcast %cst_37 : f32 to vector<2x32xf32>
    %41 = arith.maximumf %39, %40 : vector<2x32xf32>
    %c0_38 = arith.constant 0 : index
    %c0_39 = arith.constant 0 : index
    %42 = vector.load %arg3[%c0_38, %c0_39] : memref<1x8xi32, #tpu.memory_space<vmem>>, vector<1x8xi32>
    %c0_40 = arith.constant 0 : index
    %c0_41 = arith.constant 0 : index
    %43 = vector.load %arg4[%c0_40, %c0_41] : memref<8x1xi32, #tpu.memory_space<vmem>>, vector<8x1xi32>
    %44 = tpu.iota {dimensions = array<i32: 0>} : vector<2x8xi32>
    %45 = vector.broadcast %42 : vector<1x8xi32> to vector<2x8xi32>
    %46 = arith.cmpi eq, %44, %45 : vector<2x8xi32>
    %47 = arith.extui %46 : vector<2x8xi1> to vector<2x8xi32>
    %48 = arith.sitofp %47 : vector<2x8xi32> to vector<2x8xf32>
    %49 = tpu.iota {dimensions = array<i32: 1>} : vector<8x2xi32>
    %50 = vector.broadcast %43 : vector<8x1xi32> to vector<8x2xi32>
    %51 = arith.cmpi eq, %49, %50 : vector<8x2xi32>
    %52 = arith.extui %51 : vector<8x2xi1> to vector<8x2xi32>
    %53 = arith.sitofp %52 : vector<8x2xi32> to vector<8x2xf32>
    %cst_42 = arith.constant 0.000000e+00 : f32
    %cst_43 = arith.constant -1.000000e+30 : f32
    %54 = vector.broadcast %cst_42 : f32 to vector<8x2xf32>
    %55 = vector.broadcast %cst_43 : f32 to vector<8x2xf32>
    %56 = arith.select %51, %54, %55 : vector<8x2xi1>, vector<8x2xf32>
    %cst_44 = arith.constant dense<0.000000e+00> : vector<2xf32>
    %57 = vector.multi_reduction <add>, %48, %cst_44 [1] : vector<2x8xf32> to vector<2xf32>
    %58 = vector.shape_cast %57 : vector<2xf32> to vector<2x1xf32>
    %59 = tpu.reciprocal %58 {approx = true} : vector<2x1xf32> -> vector<2x1xf32>
    %c0_45 = arith.constant 0 : index
    %c0_46 = arith.constant 0 : index
    %60 = vector.load %arg5[%c0_45, %c0_46] : memref<8x32xf32, #tpu.memory_space<vmem>>, vector<8x32xf32>
    %cst_47 = arith.constant dense<0.000000e+00> : vector<2x32xf32>
    %61 = tpu.matmul %48, %60, %cst_47 {dimension_numbers = #tpu.dot_dimension_numbers<[1], [0], [0], [1], [0, 0, 1, 1], [], []>} : vector<2x8xf32>, vector<8x32xf32>, vector<2x32xf32> -> vector<2x32xf32>
    %62 = vector.broadcast %59 : vector<2x1xf32> to vector<2x32xf32>
    %63 = arith.mulf %61, %62 : vector<2x32xf32>
    %c0_48 = arith.constant 0 : index
    %c0_49 = arith.constant 0 : index
    %64 = vector.load %arg2[%c0_48, %c0_49] : memref<8x8xbf16, #tpu.memory_space<vmem>>, vector<8x8xbf16>
    %c0_50 = arith.constant 0 : index
    %c0_51 = arith.constant 0 : index
    %65 = vector.load %arg8[%c0_50, %c0_51] : memref<32x32xf32, #tpu.memory_space<vmem>>, vector<32x32xf32>
    %66 = vector.broadcast %4 : vector<1x32xf32> to vector<8x32xf32>
    %67 = arith.subf %60, %66 : vector<8x32xf32>
    %cst_52 = arith.constant 9.99999974E-6 : f32
    %68 = vector.broadcast %cst_52 : f32 to vector<1x32xf32>
    %69 = arith.addf %5, %68 : vector<1x32xf32>
    %70 = math.rsqrt %69 : vector<1x32xf32>
    %71 = vector.broadcast %70 : vector<1x32xf32> to vector<8x32xf32>
    %72 = arith.mulf %67, %71 : vector<8x32xf32>
    %73 = vector.broadcast %2 : vector<1x32xf32> to vector<8x32xf32>
    %74 = arith.mulf %72, %73 : vector<8x32xf32>
    %75 = vector.broadcast %3 : vector<1x32xf32> to vector<8x32xf32>
    %76 = arith.addf %74, %75 : vector<8x32xf32>
    %77 = arith.truncf %76 : vector<8x32xf32> to vector<8x32xbf16>
    %cst_53 = arith.constant dense<0.000000e+00> : vector<8x32xf32>
    %78 = tpu.matmul %64, %77, %cst_53 {dimension_numbers = #tpu.dot_dimension_numbers<[1], [0], [0], [1], [0, 0, 1, 1], [], []>} : vector<8x8xbf16>, vector<8x32xbf16>, vector<8x32xf32> -> vector<8x32xf32>
    %cst_54 = arith.constant dense<0.000000e+00> : vector<8x32xf32>
    %79 = tpu.matmul %78, %65, %cst_54 {dimension_numbers = #tpu.dot_dimension_numbers<[1], [0], [0], [1], [0, 0, 1, 1], [], []>} : vector<8x32xf32>, vector<32x32xf32>, vector<8x32xf32> -> vector<8x32xf32>
    %80 = vector.broadcast %6 : vector<1x32xf32> to vector<8x32xf32>
    %81 = arith.addf %79, %80 : vector<8x32xf32>
    %cst_55 = arith.constant 0.000000e+00 : f32
    %82 = vector.broadcast %cst_55 : f32 to vector<8x32xf32>
    %83 = arith.maximumf %81, %82 : vector<8x32xf32>
    %84 = arith.addf %60, %83 : vector<8x32xf32>
    %c0_56 = arith.constant 0 : index
    %c0_57 = arith.constant 0 : index
    %85 = vector.load %arg9[%c0_56, %c0_57] : memref<32x32xf32, #tpu.memory_space<vmem>>, vector<32x32xf32>
    %86 = vector.broadcast %9 : vector<1x32xf32> to vector<8x32xf32>
    %87 = arith.subf %84, %86 : vector<8x32xf32>
    %cst_58 = arith.constant 9.99999974E-6 : f32
    %88 = vector.broadcast %cst_58 : f32 to vector<1x32xf32>
    %89 = arith.addf %10, %88 : vector<1x32xf32>
    %90 = math.rsqrt %89 : vector<1x32xf32>
    %91 = vector.broadcast %90 : vector<1x32xf32> to vector<8x32xf32>
    %92 = arith.mulf %87, %91 : vector<8x32xf32>
    %93 = vector.broadcast %7 : vector<1x32xf32> to vector<8x32xf32>
    %94 = arith.mulf %92, %93 : vector<8x32xf32>
    %95 = vector.broadcast %8 : vector<1x32xf32> to vector<8x32xf32>
    %96 = arith.addf %94, %95 : vector<8x32xf32>
    %97 = arith.truncf %96 : vector<8x32xf32> to vector<8x32xbf16>
    %cst_59 = arith.constant dense<0.000000e+00> : vector<8x32xf32>
    %98 = tpu.matmul %64, %97, %cst_59 {dimension_numbers = #tpu.dot_dimension_numbers<[1], [0], [0], [1], [0, 0, 1, 1], [], []>} : vector<8x8xbf16>, vector<8x32xbf16>, vector<8x32xf32> -> vector<8x32xf32>
    %cst_60 = arith.constant dense<0.000000e+00> : vector<8x32xf32>
    %99 = tpu.matmul %98, %85, %cst_60 {dimension_numbers = #tpu.dot_dimension_numbers<[1], [0], [0], [1], [0, 0, 1, 1], [], []>} : vector<8x32xf32>, vector<32x32xf32>, vector<8x32xf32> -> vector<8x32xf32>
    %100 = vector.broadcast %11 : vector<1x32xf32> to vector<8x32xf32>
    %101 = arith.addf %99, %100 : vector<8x32xf32>
    %cst_61 = arith.constant 0.000000e+00 : f32
    %102 = vector.broadcast %cst_61 : f32 to vector<8x32xf32>
    %103 = arith.maximumf %101, %102 : vector<8x32xf32>
    %104 = arith.addf %84, %103 : vector<8x32xf32>
    %cst_62 = arith.constant dense<0.000000e+00> : vector<8x32xf32>
    %105 = tpu.matmul %53, %41, %cst_62 {dimension_numbers = #tpu.dot_dimension_numbers<[1], [0], [0], [1], [0, 0, 1, 1], [], []>} : vector<8x2xf32>, vector<2x32xf32>, vector<8x32xf32> -> vector<8x32xf32>
    %c0_63 = arith.constant 0 : index
    %c0_64 = arith.constant 0 : index
    %c0_65 = arith.constant 0 : index
    %106 = vector.load %arg10[%c0_63, %c0_64, %c0_65] : memref<3x32x64xf32, #tpu.memory_space<vmem>>, vector<1x32x64xf32>
    %107 = vector.shape_cast %106 : vector<1x32x64xf32> to vector<32x64xf32>
    %cst_66 = arith.constant dense<0.000000e+00> : vector<8x64xf32>
    %108 = tpu.matmul %104, %107, %cst_66 {dimension_numbers = #tpu.dot_dimension_numbers<[1], [0], [0], [1], [0, 0, 1, 1], [], []>} : vector<8x32xf32>, vector<32x64xf32>, vector<8x64xf32> -> vector<8x64xf32>
    %c1_67 = arith.constant 1 : index
    %c0_68 = arith.constant 0 : index
    %c0_69 = arith.constant 0 : index
    %109 = vector.load %arg10[%c1_67, %c0_68, %c0_69] : memref<3x32x64xf32, #tpu.memory_space<vmem>>, vector<1x32x64xf32>
    %110 = vector.shape_cast %109 : vector<1x32x64xf32> to vector<32x64xf32>
    %cst_70 = arith.constant dense<0.000000e+00> : vector<8x64xf32>
    %111 = tpu.matmul %105, %110, %cst_70 {dimension_numbers = #tpu.dot_dimension_numbers<[1], [0], [0], [1], [0, 0, 1, 1], [], []>} : vector<8x32xf32>, vector<32x64xf32>, vector<8x64xf32> -> vector<8x64xf32>
    %c2_71 = arith.constant 2 : index
    %c0_72 = arith.constant 0 : index
    %c0_73 = arith.constant 0 : index
    %112 = vector.load %arg10[%c2_71, %c0_72, %c0_73] : memref<3x32x64xf32, #tpu.memory_space<vmem>>, vector<1x32x64xf32>
    %113 = vector.shape_cast %112 : vector<1x32x64xf32> to vector<32x64xf32>
    %cst_74 = arith.constant dense<0.000000e+00> : vector<8x64xf32>
    %114 = tpu.matmul %104, %113, %cst_74 {dimension_numbers = #tpu.dot_dimension_numbers<[1], [0], [0], [1], [0, 0, 1, 1], [], []>} : vector<8x32xf32>, vector<32x64xf32>, vector<8x64xf32> -> vector<8x64xf32>
    %115 = arith.mulf %108, %111 : vector<8x64xf32>
    %cst_75 = arith.constant 0.0279508494 : f32
    %116 = vector.broadcast %cst_75 : f32 to vector<8x64xf32>
    %117 = arith.mulf %115, %116 : vector<8x64xf32>
    %118 = vector.extract_strided_slice %117 {offsets = [0, 0], sizes = [8, 32], strides = [1, 1]} : vector<8x64xf32> to vector<8x32xf32>
    %cst_76 = arith.constant dense<0.000000e+00> : vector<8xf32>
    %119 = vector.multi_reduction <add>, %118, %cst_76 [1] : vector<8x32xf32> to vector<8xf32>
    %120 = vector.shape_cast %119 : vector<8xf32> to vector<8x1xf32>
    %121 = vector.extract_strided_slice %117 {offsets = [0, 32], sizes = [8, 32], strides = [1, 1]} : vector<8x64xf32> to vector<8x32xf32>
    %cst_77 = arith.constant dense<0.000000e+00> : vector<8xf32>
    %122 = vector.multi_reduction <add>, %121, %cst_77 [1] : vector<8x32xf32> to vector<8xf32>
    %123 = vector.shape_cast %122 : vector<8xf32> to vector<8x1xf32>
    %124 = vector.broadcast %120 : vector<8x1xf32> to vector<8x2xf32>
    %125 = arith.addf %124, %56 : vector<8x2xf32>
    %126 = vector.broadcast %123 : vector<8x1xf32> to vector<8x2xf32>
    %127 = arith.addf %126, %56 : vector<8x2xf32>
    %128 = tpu.concatenate %125, %127 in 1 : vector<8x2xf32>, vector<8x2xf32> -> vector<8x4xf32>
    %cst_78 = arith.constant dense<0xFF800000> : vector<4xf32>
    %129 = vector.multi_reduction <maximumf>, %128, %cst_78 [0] : vector<8x4xf32> to vector<4xf32>
    %130 = vector.shape_cast %129 : vector<4xf32> to vector<1x4xf32>
    %131 = vector.broadcast %130 : vector<1x4xf32> to vector<8x4xf32>
    %132 = arith.subf %128, %131 : vector<8x4xf32>
    %133 = math.exp %132 : vector<8x4xf32>
    %cst_79 = arith.constant dense<0.000000e+00> : vector<4xf32>
    %134 = vector.multi_reduction <add>, %133, %cst_79 [0] : vector<8x4xf32> to vector<4xf32>
    %135 = vector.shape_cast %134 : vector<4xf32> to vector<1x4xf32>
    %136 = tpu.reciprocal %135 {approx = true} : vector<1x4xf32> -> vector<1x4xf32>
    %137 = vector.broadcast %136 : vector<1x4xf32> to vector<8x4xf32>
    %138 = arith.mulf %133, %137 : vector<8x4xf32>
    %139 = vector.extract_strided_slice %138 {offsets = [0, 0], sizes = [8, 2], strides = [1, 1]} : vector<8x4xf32> to vector<8x2xf32>
    %cst_80 = arith.constant dense<0.000000e+00> : vector<8xf32>
    %140 = vector.multi_reduction <add>, %139, %cst_80 [1] : vector<8x2xf32> to vector<8xf32>
    %141 = vector.shape_cast %140 : vector<8xf32> to vector<8x1xf32>
    %142 = vector.extract_strided_slice %114 {offsets = [0, 0], sizes = [8, 32], strides = [1, 1]} : vector<8x64xf32> to vector<8x32xf32>
    %143 = vector.broadcast %141 : vector<8x1xf32> to vector<8x32xf32>
    %144 = arith.mulf %142, %143 : vector<8x32xf32>
    %145 = vector.extract_strided_slice %138 {offsets = [0, 2], sizes = [8, 2], strides = [1, 1]} : vector<8x4xf32> to vector<8x2xf32>
    %cst_81 = arith.constant dense<0.000000e+00> : vector<8xf32>
    %146 = vector.multi_reduction <add>, %145, %cst_81 [1] : vector<8x2xf32> to vector<8xf32>
    %147 = vector.shape_cast %146 : vector<8xf32> to vector<8x1xf32>
    %148 = vector.extract_strided_slice %114 {offsets = [0, 32], sizes = [8, 32], strides = [1, 1]} : vector<8x64xf32> to vector<8x32xf32>
    %149 = vector.broadcast %147 : vector<8x1xf32> to vector<8x32xf32>
    %150 = arith.mulf %148, %149 : vector<8x32xf32>
    %151 = tpu.concatenate %144, %150 in 1 : vector<8x32xf32>, vector<8x32xf32> -> vector<8x64xf32>
    %c0_82 = arith.constant 0 : index
    %c0_83 = arith.constant 0 : index
    %152 = vector.load %arg11[%c0_82, %c0_83] : memref<64x32xf32, #tpu.memory_space<vmem>>, vector<64x32xf32>
    %cst_84 = arith.constant dense<0.000000e+00> : vector<8x32xf32>
    %153 = tpu.matmul %151, %152, %cst_84 {dimension_numbers = #tpu.dot_dimension_numbers<[1], [0], [0], [1], [0, 0, 1, 1], [], []>} : vector<8x64xf32>, vector<64x32xf32>, vector<8x32xf32> -> vector<8x32xf32>
    %154 = arith.addf %153, %104 : vector<8x32xf32>
    %cst_85 = arith.constant dense<0.000000e+00> : vector<8xf32>
    %155 = vector.multi_reduction <add>, %154, %cst_85 [1] : vector<8x32xf32> to vector<8xf32>
    %156 = vector.shape_cast %155 : vector<8xf32> to vector<8x1xf32>
    %cst_86 = arith.constant 3.200000e+01 : f32
    %157 = vector.broadcast %cst_86 : f32 to vector<8x1xf32>
    %158 = arith.divf %156, %157 : vector<8x1xf32>
    %159 = vector.broadcast %158 : vector<8x1xf32> to vector<8x32xf32>
    %160 = arith.subf %154, %159 : vector<8x32xf32>
    %161 = arith.mulf %160, %160 : vector<8x32xf32>
    %cst_87 = arith.constant dense<0.000000e+00> : vector<8xf32>
    %162 = vector.multi_reduction <add>, %161, %cst_87 [1] : vector<8x32xf32> to vector<8xf32>
    %163 = vector.shape_cast %162 : vector<8xf32> to vector<8x1xf32>
    %cst_88 = arith.constant 3.200000e+01 : f32
    %164 = vector.broadcast %cst_88 : f32 to vector<8x1xf32>
    %165 = arith.divf %163, %164 : vector<8x1xf32>
    %166 = vector.broadcast %158 : vector<8x1xf32> to vector<8x32xf32>
    %167 = arith.subf %154, %166 : vector<8x32xf32>
    %cst_89 = arith.constant 9.99999974E-6 : f32
    %168 = vector.broadcast %cst_89 : f32 to vector<8x1xf32>
    %169 = arith.addf %165, %168 : vector<8x1xf32>
    %170 = math.rsqrt %169 : vector<8x1xf32>
    %171 = vector.broadcast %170 : vector<8x1xf32> to vector<8x32xf32>
    %172 = arith.mulf %167, %171 : vector<8x32xf32>
    %173 = vector.broadcast %14 : vector<1x32xf32> to vector<8x32xf32>
    %174 = arith.mulf %172, %173 : vector<8x32xf32>
    %175 = vector.broadcast %15 : vector<1x32xf32> to vector<8x32xf32>
    %176 = arith.addf %174, %175 : vector<8x32xf32>
    %c0_90 = arith.constant 0 : index
    %c0_91 = arith.constant 0 : index
    %177 = vector.load %arg12[%c0_90, %c0_91] : memref<32x64xf32, #tpu.memory_space<vmem>>, vector<32x64xf32>
    %cst_92 = arith.constant dense<0.000000e+00> : vector<8x64xf32>
    %178 = tpu.matmul %176, %177, %cst_92 {dimension_numbers = #tpu.dot_dimension_numbers<[1], [0], [0], [1], [0, 0, 1, 1], [], []>} : vector<8x32xf32>, vector<32x64xf32>, vector<8x64xf32> -> vector<8x64xf32>
    %179 = vector.broadcast %12 : vector<1x64xf32> to vector<8x64xf32>
    %180 = arith.addf %178, %179 : vector<8x64xf32>
    %cst_93 = arith.constant 0.000000e+00 : f32
    %181 = vector.broadcast %cst_93 : f32 to vector<8x64xf32>
    %182 = arith.maximumf %180, %181 : vector<8x64xf32>
    %c0_94 = arith.constant 0 : index
    %c0_95 = arith.constant 0 : index
    %183 = vector.load %arg13[%c0_94, %c0_95] : memref<64x32xf32, #tpu.memory_space<vmem>>, vector<64x32xf32>
    %cst_96 = arith.constant dense<0.000000e+00> : vector<8x32xf32>
    %184 = tpu.matmul %182, %183, %cst_96 {dimension_numbers = #tpu.dot_dimension_numbers<[1], [0], [0], [1], [0, 0, 1, 1], [], []>} : vector<8x64xf32>, vector<64x32xf32>, vector<8x32xf32> -> vector<8x32xf32>
    %185 = vector.broadcast %13 : vector<1x32xf32> to vector<8x32xf32>
    %186 = arith.addf %184, %185 : vector<8x32xf32>
    %187 = arith.addf %186, %176 : vector<8x32xf32>
    %cst_97 = arith.constant dense<0.000000e+00> : vector<8xf32>
    %188 = vector.multi_reduction <add>, %187, %cst_97 [1] : vector<8x32xf32> to vector<8xf32>
    %189 = vector.shape_cast %188 : vector<8xf32> to vector<8x1xf32>
    %cst_98 = arith.constant 3.200000e+01 : f32
    %190 = vector.broadcast %cst_98 : f32 to vector<8x1xf32>
    %191 = arith.divf %189, %190 : vector<8x1xf32>
    %192 = vector.broadcast %191 : vector<8x1xf32> to vector<8x32xf32>
    %193 = arith.subf %187, %192 : vector<8x32xf32>
    %194 = arith.mulf %193, %193 : vector<8x32xf32>
    %cst_99 = arith.constant dense<0.000000e+00> : vector<8xf32>
    %195 = vector.multi_reduction <add>, %194, %cst_99 [1] : vector<8x32xf32> to vector<8xf32>
    %196 = vector.shape_cast %195 : vector<8xf32> to vector<8x1xf32>
    %cst_100 = arith.constant 3.200000e+01 : f32
    %197 = vector.broadcast %cst_100 : f32 to vector<8x1xf32>
    %198 = arith.divf %196, %197 : vector<8x1xf32>
    %199 = vector.broadcast %191 : vector<8x1xf32> to vector<8x32xf32>
    %200 = arith.subf %187, %199 : vector<8x32xf32>
    %cst_101 = arith.constant 9.99999974E-6 : f32
    %201 = vector.broadcast %cst_101 : f32 to vector<8x1xf32>
    %202 = arith.addf %198, %201 : vector<8x1xf32>
    %203 = math.rsqrt %202 : vector<8x1xf32>
    %204 = vector.broadcast %203 : vector<8x1xf32> to vector<8x32xf32>
    %205 = arith.mulf %200, %204 : vector<8x32xf32>
    %206 = vector.broadcast %14 : vector<1x32xf32> to vector<8x32xf32>
    %207 = arith.mulf %205, %206 : vector<8x32xf32>
    %208 = vector.broadcast %15 : vector<1x32xf32> to vector<8x32xf32>
    %209 = arith.addf %207, %208 : vector<8x32xf32>
    %cst_102 = arith.constant dense<0.000000e+00> : vector<2x32xf32>
    %210 = tpu.matmul %48, %209, %cst_102 {dimension_numbers = #tpu.dot_dimension_numbers<[1], [0], [0], [1], [0, 0, 1, 1], [], []>} : vector<2x8xf32>, vector<8x32xf32>, vector<2x32xf32> -> vector<2x32xf32>
    %211 = tpu.concatenate %63, %210 in 1 : vector<2x32xf32>, vector<2x32xf32> -> vector<2x64xf32>
    %212 = vector.broadcast %18 : vector<1x64xf32> to vector<2x64xf32>
    %213 = arith.subf %211, %212 : vector<2x64xf32>
    %cst_103 = arith.constant 9.99999974E-6 : f32
    %214 = vector.broadcast %cst_103 : f32 to vector<1x64xf32>
    %215 = arith.addf %19, %214 : vector<1x64xf32>
    %216 = math.rsqrt %215 : vector<1x64xf32>
    %217 = vector.broadcast %216 : vector<1x64xf32> to vector<2x64xf32>
    %218 = arith.mulf %213, %217 : vector<2x64xf32>
    %219 = vector.broadcast %16 : vector<1x64xf32> to vector<2x64xf32>
    %220 = arith.mulf %218, %219 : vector<2x64xf32>
    %221 = vector.broadcast %17 : vector<1x64xf32> to vector<2x64xf32>
    %222 = arith.addf %220, %221 : vector<2x64xf32>
    %c0_104 = arith.constant 0 : index
    %c0_105 = arith.constant 0 : index
    %223 = vector.load %arg14[%c0_104, %c0_105] : memref<64x128xf32, #tpu.memory_space<vmem>>, vector<64x128xf32>
    %cst_106 = arith.constant dense<0.000000e+00> : vector<2x128xf32>
    %224 = tpu.matmul %222, %223, %cst_106 {dimension_numbers = #tpu.dot_dimension_numbers<[1], [0], [0], [1], [0, 0, 1, 1], [], []>} : vector<2x64xf32>, vector<64x128xf32>, vector<2x128xf32> -> vector<2x128xf32>
    %225 = vector.broadcast %20 : vector<1x128xf32> to vector<2x128xf32>
    %226 = arith.addf %224, %225 : vector<2x128xf32>
    %cst_107 = arith.constant 0.000000e+00 : f32
    %227 = vector.broadcast %cst_107 : f32 to vector<2x128xf32>
    %228 = arith.maximumf %226, %227 : vector<2x128xf32>
    %c0_108 = arith.constant 0 : index
    %c0_109 = arith.constant 0 : index
    %229 = vector.load %arg15[%c0_108, %c0_109] : memref<128x128xf32, #tpu.memory_space<vmem>>, vector<128x128xf32>
    %cst_110 = arith.constant dense<0.000000e+00> : vector<2x128xf32>
    %230 = tpu.matmul %228, %229, %cst_110 {dimension_numbers = #tpu.dot_dimension_numbers<[1], [0], [0], [1], [0, 0, 1, 1], [], []>} : vector<2x128xf32>, vector<128x128xf32>, vector<2x128xf32> -> vector<2x128xf32>
    %231 = vector.broadcast %21 : vector<1x128xf32> to vector<2x128xf32>
    %232 = arith.addf %230, %231 : vector<2x128xf32>
    %cst_111 = arith.constant 0.000000e+00 : f32
    %233 = vector.broadcast %cst_111 : f32 to vector<2x128xf32>
    %234 = arith.maximumf %232, %233 : vector<2x128xf32>
    %c0_112 = arith.constant 0 : index
    %c0_113 = arith.constant 0 : index
    %235 = vector.load %arg16[%c0_112, %c0_113] : memref<128x128xf32, #tpu.memory_space<vmem>>, vector<128x128xf32>
    %cst_114 = arith.constant dense<0.000000e+00> : vector<2x128xf32>
    %236 = tpu.matmul %234, %235, %cst_114 {dimension_numbers = #tpu.dot_dimension_numbers<[1], [0], [0], [1], [0, 0, 1, 1], [], []>} : vector<2x128xf32>, vector<128x128xf32>, vector<2x128xf32> -> vector<2x128xf32>
    %237 = vector.broadcast %22 : vector<1x128xf32> to vector<2x128xf32>
    %238 = arith.addf %236, %237 : vector<2x128xf32>
    %c0_115 = arith.constant 0 : index
    %c0_116 = arith.constant 0 : index
    %239 = vector.load %arg17[%c0_115, %c0_116] : memref<2x128xf32, #tpu.memory_space<vmem>>, vector<2x128xf32>
    tpu.vector_store %arg17[%c0_115, %c0_116], %238 {strides = array<i32>} : memref<2x128xf32, #tpu.memory_space<vmem>>, vector<2x128xf32>,
    return
  }
}

</mosaic_0001>

<llo_original>
// kernel: combine_inter_model_forward.1
$region0: #{combine_inter_model_forward.1}
  #allocation0 [shape = 'u32[]', space=smem, size = 0x4, offset = 0x4, fixed_abs, tag = 'smem constant byte address 0x4 - core index']
  #allocation1 [shape = 'u32[144,128]{1,0:T(1,128)}', space=vmem, size = 0x12000, scoped, tag = 'internal scratch']
  %s0 = inlined_call_operand.hbm [shape: f32[2,64], index: 0, kind: input, shape index: {}]
  %s1 = inlined_call_operand.vmem [shape: f32[64,32], index: 1, kind: input, shape index: {}]
  %s2 = inlined_call_operand.vmem [shape: bf16[8,8], index: 2, kind: input, shape index: {}]
  %s3 = inlined_call_operand.vmem [shape: s32[1,8], index: 3, kind: input, shape index: {}]
  %s4 = inlined_call_operand.vmem [shape: s32[8,1], index: 4, kind: input, shape index: {}]
  %s5 = inlined_call_operand.vmem [shape: f32[8,32], index: 5, kind: input, shape index: {}]
  %s6 = inlined_call_operand.hbm [shape: f32[23,128], index: 6, kind: input, shape index: {}]
  %s7 = inlined_call_operand.hbm [shape: f32[2,32,32], index: 7, kind: input, shape index: {}]
  %s8 = inlined_call_operand.hbm [shape: f32[32,32], index: 8, kind: input, shape index: {}]
  %s9 = inlined_call_operand.hbm [shape: f32[32,32], index: 9, kind: input, shape index: {}]
  %s10 = inlined_call_operand.vmem [shape: f32[3,32,64], index: 10, kind: input, shape index: {}]
  %s11 = inlined_call_operand.vmem [shape: f32[64,32], index: 11, kind: input, shape index: {}]
  %s12 = inlined_call_operand.hbm [shape: f32[32,64], index: 12, kind: input, shape index: {}]
  %s13 = inlined_call_operand.vmem [shape: f32[64,32], index: 13, kind: input, shape index: {}]
  %s14 = inlined_call_operand.hbm [shape: f32[64,128], index: 14, kind: input, shape index: {}]
  %s15 = inlined_call_operand.vmem [shape: f32[128,128], index: 15, kind: input, shape index: {}]
  %s16 = inlined_call_operand.vmem [shape: f32[128,128], index: 16, kind: input, shape index: {}]
  %s17 = inlined_call_operand.hbm [shape: f32[2,128], index: 17, kind: output, shape index: {}]
  %s18 = sld [smem:[#allocation0]]
  $region106: #{combine_inter_model_forward.1} parent=0
    _
  %s20 = ssub.s32 1, %s18
  %s21 = scalar_select 0, %s20, %s18
  $region1: #{combine_inter_model_forward.1} parent=0
    #allocation2 [shape = 'u8[1024]{0}', space=vmem, size = 0x400, scoped, tag = 'input window, operand 0, single buffered']
    #allocation3 [shape = 's32[1]{0}', space=sflag, size = 0x4, scoped, tag = 'scoped memory for combine_inter_model_forward.1']
    #allocation4 [shape = 's32[1]{0}', space=sflag, size = 0x4, scoped, tag = 'scoped memory for combine_inter_model_forward.1']
    #allocation5 [shape = 'u8[12288]{0}', space=vmem, size = 0x3000, scoped, tag = 'input window, operand 6, single buffered']
    #allocation6 [shape = 's32[1]{0}', space=sflag, size = 0x4, scoped, tag = 'scoped memory for combine_inter_model_forward.1']
    #allocation7 [shape = 'u8[32768]{0}', space=vmem, size = 0x8000, scoped, tag = 'input window, operand 7, single buffered']
    #allocation8 [shape = 'u8[16384]{0}', space=vmem, size = 0x4000, scoped, tag = 'input window, operand 8, single buffered']
    #allocation9 [shape = 's32[1]{0}', space=sflag, size = 0x4, scoped, tag = 'scoped memory for combine_inter_model_forward.1']
    #allocation10 [shape = 'u8[16384]{0}', space=vmem, size = 0x4000, scoped, tag = 'input window, operand 9, single buffered']
    #allocation11 [shape = 'u8[16384]{0}', space=vmem, size = 0x4000, scoped, tag = 'input window, operand 12, single buffered']
    #allocation12 [shape = 's32[1]{0}', space=sflag, size = 0x4, scoped, tag = 'scoped memory for combine_inter_model_forward.1']
    #allocation13 [shape = 'u8[32768]{0}', space=vmem, size = 0x8000, scoped, tag = 'input window, operand 14, single buffered']
    #allocation14 [shape = 'u8[1024]{0}', space=vmem, size = 0x400, scoped, tag = 'output window, operand 0, single buffered']
    %22 = vsyncpa [#allocation3], 0
    %23 = vsyncpa [#allocation6], 0
    %24 = vsyncpa [#allocation9], 0
    %25 = vsyncpa [#allocation12], 0
    %26 = vsyncpa [#allocation4], 0
    // Predicated region
    $region2: #{combine_inter_model_forward.1} parent=1 // pred_check
      _
    $region3: #{combine_inter_model_forward.1} parent=1 // pred_check_branch
      %28 = sbr.rel (0) target = $region5
    $region4: #{combine_inter_model_forward.1} parent=1 // pred_region
      %s30 = ssub.s32 32, 32
      %31 = vsyncadd [#allocation3], %s30
      %s33 = sshll.u32 [#allocation2], 4
      %s34 = int_to_ptr.vmem [resolvable:$true] %s33
      %36 = dma.hbm_to_vmem [thread:$0]  %s0, 32, %s34, [#allocation3]
    $region5: #{combine_inter_model_forward.1} parent=1 // pred_fallthru
      _
    // Predicated region
    $region6: #{combine_inter_model_forward.1} parent=1 // pred_check
      _
    $region7: #{combine_inter_model_forward.1} parent=1 // pred_check_branch
      %38 = sbr.rel (0) target = $region9
    $region8: #{combine_inter_model_forward.1} parent=1 // pred_region
      _
    $region9: #{combine_inter_model_forward.1} parent=1 // pred_fallthru
      _
    // Predicated region
    $region10: #{combine_inter_model_forward.1} parent=1 // pred_check
      _
    $region11: #{combine_inter_model_forward.1} parent=1 // pred_check_branch
      %40 = sbr.rel (0) target = $region13
    $region12: #{combine_inter_model_forward.1} parent=1 // pred_region
      _
    $region13: #{combine_inter_model_forward.1} parent=1 // pred_fallthru
      _
    // Predicated region
    $region14: #{combine_inter_model_forward.1} parent=1 // pred_check
      _
    $region15: #{combine_inter_model_forward.1} parent=1 // pred_check_branch
      %42 = sbr.rel (0) target = $region17
    $region16: #{combine_inter_model_forward.1} parent=1 // pred_region
      _
    $region17: #{combine_inter_model_forward.1} parent=1 // pred_fallthru
      _
    // Predicated region
    $region18: #{combine_inter_model_forward.1} parent=1 // pred_check
      _
    $region19: #{combine_inter_model_forward.1} parent=1 // pred_check_branch
      %44 = sbr.rel (0) target = $region21
    $region20: #{combine_inter_model_forward.1} parent=1 // pred_region
      _
    $region21: #{combine_inter_model_forward.1} parent=1 // pred_fallthru
      _
    // Predicated region
    $region22: #{combine_inter_model_forward.1} parent=1 // pred_check
      _
    $region23: #{combine_inter_model_forward.1} parent=1 // pred_check_branch
      %46 = sbr.rel (0) target = $region25
    $region24: #{combine_inter_model_forward.1} parent=1 // pred_region
      _
    $region25: #{combine_inter_model_forward.1} parent=1 // pred_fallthru
      _
    // Predicated region
    $region26: #{combine_inter_model_forward.1} parent=1 // pred_check
      _
    $region27: #{combine_inter_model_forward.1} parent=1 // pred_check_branch
      %48 = sbr.rel (0) target = $region29
    $region28: #{combine_inter_model_forward.1} parent=1 // pred_region
      %s50 = ssub.s32 384, 384
      %51 = vsyncadd [#allocation6], %s50
      %s52 = sshll.u32 [#allocation5], 4
      %s53 = int_to_ptr.vmem [resolvable:$true] %s52
      %58 = dma.hbm_to_vmem [thread:$0]  %s6, 384, %s53, [#allocation6], 128, 128, 8
    $region29: #{combine_inter_model_forward.1} parent=1 // pred_fallthru
      _
    // Predicated region
    $region30: #{combine_inter_model_forward.1} parent=1 // pred_check
      _
    $region31: #{combine_inter_model_forward.1} parent=1 // pred_check_branch
      %60 = sbr.rel (0) target = $region33
    $region32: #{combine_inter_model_forward.1} parent=1 // pred_region
      %s62 = ssub.s32 1024, 1024
      %63 = vsyncadd [#allocation6], %s62
      %s64 = sshll.u32 [#allocation7], 4
      %s65 = int_to_ptr.vmem [resolvable:$true] %s64
      %70 = dma.hbm_to_vmem [thread:$0]  %s7, 1024, %s65, [#allocation6], 128, 128, 8
    $region33: #{combine_inter_model_forward.1} parent=1 // pred_fallthru
      _
    // Predicated region
    $region34: #{combine_inter_model_forward.1} parent=1 // pred_check
      _
    $region35: #{combine_inter_model_forward.1} parent=1 // pred_check_branch
      %72 = sbr.rel (0) target = $region37
    $region36: #{combine_inter_model_forward.1} parent=1 // pred_region
      %s74 = ssub.s32 512, 512
      %75 = vsyncadd [#allocation9], %s74
      %s76 = sshll.u32 [#allocation8], 4
      %s77 = int_to_ptr.vmem [resolvable:$true] %s76
      %82 = dma.hbm_to_vmem [thread:$0]  %s8, 512, %s77, [#allocation9], 128, 128, 8
    $region37: #{combine_inter_model_forward.1} parent=1 // pred_fallthru
      _
    // Predicated region
    $region38: #{combine_inter_model_forward.1} parent=1 // pred_check
      _
    $region39: #{combine_inter_model_forward.1} parent=1 // pred_check_branch
      %84 = sbr.rel (0) target = $region41
    $region40: #{combine_inter_model_forward.1} parent=1 // pred_region
      %s86 = ssub.s32 512, 512
      %87 = vsyncadd [#allocation9], %s86
      %s88 = sshll.u32 [#allocation10], 4
      %s89 = int_to_ptr.vmem [resolvable:$true] %s88
      %94 = dma.hbm_to_vmem [thread:$0]  %s9, 512, %s89, [#allocation9], 128, 128, 8
    $region41: #{combine_inter_model_forward.1} parent=1 // pred_fallthru
      _
    // Predicated region
    $region42: #{combine_inter_model_forward.1} parent=1 // pred_check
      _
    $region43: #{combine_inter_model_forward.1} parent=1 // pred_check_branch
      %96 = sbr.rel (0) target = $region45
    $region44: #{combine_inter_model_forward.1} parent=1 // pred_region
      _
    $region45: #{combine_inter_model_forward.1} parent=1 // pred_fallthru
      _
    // Predicated region
    $region46: #{combine_inter_model_forward.1} parent=1 // pred_check
      _
    $region47: #{combine_inter_model_forward.1} parent=1 // pred_check_branch
      %98 = sbr.rel (0) target = $region49
    $region48: #{combine_inter_model_forward.1} parent=1 // pred_region
      _
    $region49: #{combine_inter_model_forward.1} parent=1 // pred_fallthru
      _
    // Predicated region
    $region50: #{combine_inter_model_forward.1} parent=1 // pred_check
      _
    $region51: #{combine_inter_model_forward.1} parent=1 // pred_check_branch
      %100 = sbr.rel (0) target = $region53
    $region52: #{combine_inter_model_forward.1} parent=1 // pred_region
      %s102 = ssub.s32 512, 512
      %103 = vsyncadd [#allocation12], %s102
      %s104 = sshll.u32 [#allocation11], 4
      %s105 = int_to_ptr.vmem [resolvable:$true] %s104
      %110 = dma.hbm_to_vmem [thread:$0]  %s12, 512, %s105, [#allocation12], 128, 128, 8
    $region53: #{combine_inter_model_forward.1} parent=1 // pred_fallthru
      _
    // Predicated region
    $region54: #{combine_inter_model_forward.1} parent=1 // pred_check
      _
    $region55: #{combine_inter_model_forward.1} parent=1 // pred_check_branch
      %112 = sbr.rel (0) target = $region57
    $region56: #{combine_inter_model_forward.1} parent=1 // pred_region
      _
    $region57: #{combine_inter_model_forward.1} parent=1 // pred_fallthru
      _
    // Predicated region
    $region58: #{combine_inter_model_forward.1} parent=1 // pred_check
      _
    $region59: #{combine_inter_model_forward.1} parent=1 // pred_check_branch
      %114 = sbr.rel (0) target = $region61
    $region60: #{combine_inter_model_forward.1} parent=1 // pred_region
      %s116 = ssub.s32 1024, 1024
      %117 = vsyncadd [#allocation12], %s116
      %s118 = sshll.u32 [#allocation13], 4
      %s119 = int_to_ptr.vmem [resolvable:$true] %s118
      %124 = dma.hbm_to_vmem [thread:$0]  %s14, 1024, %s119, [#allocation12], 128, 128, 8
    $region61: #{combine_inter_model_forward.1} parent=1 // pred_fallthru
      _
    // Predicated region
    $region62: #{combine_inter_model_forward.1} parent=1 // pred_check
      _
    $region63: #{combine_inter_model_forward.1} parent=1 // pred_check_branch
      %126 = sbr.rel (0) target = $region65
    $region64: #{combine_inter_model_forward.1} parent=1 // pred_region
      _
    $region65: #{combine_inter_model_forward.1} parent=1 // pred_fallthru
      _
    // Predicated region
    $region66: #{combine_inter_model_forward.1} parent=1 // pred_check
      _
    $region67: #{combine_inter_model_forward.1} parent=1 // pred_check_branch
      %128 = sbr.rel (0) target = $region69
    $region68: #{combine_inter_model_forward.1} parent=1 // pred_region
      _
    $region69: #{combine_inter_model_forward.1} parent=1 // pred_fallthru
      _
    // Predicated region
    $region70: #{combine_inter_model_forward.1} parent=1 // pred_check
      _
    $region71: #{combine_inter_model_forward.1} parent=1 // pred_check_branch
      %130 = sbr.rel (0) target = $region73
    $region72: #{combine_inter_model_forward.1} parent=1 // pred_region
      %131 = dma.done [#allocation3], 32
    $region73: #{combine_inter_model_forward.1} parent=1 // pred_fallthru
      _
    // Predicated region
    $region74: #{combine_inter_model_forward.1} parent=1 // pred_check
      _
    $region75: #{combine_inter_model_forward.1} parent=1 // pred_check_branch
      %133 = sbr.rel (0) target = $region77
    $region76: #{combine_inter_model_forward.1} parent=1 // pred_region
      %134 = dma.done [#allocation6], 384
    $region77: #{combine_inter_model_forward.1} parent=1 // pred_fallthru
      _
    // Predicated region
    $region78: #{combine_inter_model_forward.1} parent=1 // pred_check
      _
    $region79: #{combine_inter_model_forward.1} parent=1 // pred_check_branch
      %136 = sbr.rel (0) target = $region81
    $region80: #{combine_inter_model_forward.1} parent=1 // pred_region
      %137 = dma.done [#allocation6], 1024
    $region81: #{combine_inter_model_forward.1} parent=1 // pred_fallthru
      _
    // Predicated region
    $region82: #{combine_inter_model_forward.1} parent=1 // pred_check
      _
    $region83: #{combine_inter_model_forward.1} parent=1 // pred_check_branch
      %139 = sbr.rel (0) target = $region85
    $region84: #{combine_inter_model_forward.1} parent=1 // pred_region
      %140 = dma.done [#allocation9], 512
    $region85: #{combine_inter_model_forward.1} parent=1 // pred_fallthru
      _
    // Predicated region
    $region86: #{combine_inter_model_forward.1} parent=1 // pred_check
      _
    $region87: #{combine_inter_model_forward.1} parent=1 // pred_check_branch
      %142 = sbr.rel (0) target = $region89
    $region88: #{combine_inter_model_forward.1} parent=1 // pred_region
      %143 = dma.done [#allocation9], 512
    $region89: #{combine_inter_model_forward.1} parent=1 // pred_fallthru
      _
    // Predicated region
    $region90: #{combine_inter_model_forward.1} parent=1 // pred_check
      _
    $region91: #{combine_inter_model_forward.1} parent=1 // pred_check_branch
      %145 = sbr.rel (0) target = $region93
    $region92: #{combine_inter_model_forward.1} parent=1 // pred_region
      %146 = dma.done [#allocation12], 512
    $region93: #{combine_inter_model_forward.1} parent=1 // pred_fallthru
      _
    // Predicated region
    $region94: #{combine_inter_model_forward.1} parent=1 // pred_check
      _
    $region95: #{combine_inter_model_forward.1} parent=1 // pred_check_branch
      %148 = sbr.rel (0) target = $region97
    $region96: #{combine_inter_model_forward.1} parent=1 // pred_region
      %149 = dma.done [#allocation12], 1024
    $region97: #{combine_inter_model_forward.1} parent=1 // pred_fallthru
      _
    %v151 = vld [vmem:[#allocation5] sm:$0x1]
    %v152 = vld [vmem:[#allocation5 + $0x1] sm:$0x1]
    %v153 = vld [vmem:[#allocation5 + $0x2] sm:$0x1]
    %v154 = vld [vmem:[#allocation5 + $0x3] sm:$0x1]
    %v155 = vld [vmem:[#allocation5 + $0x4] sm:$0x1]
    %v156 = vld [vmem:[#allocation5 + $0x5] sm:$0x1]
    %v157 = vld [vmem:[#allocation5 + $0x6] sm:$0x1]
    %v158 = vld [vmem:[#allocation5 + $0x7] sm:$0x1]
    %v159 = vld [vmem:[#allocation5 + $0x8] sm:$0x1]
    %v160 = vld [vmem:[#allocation5 + $0x9] sm:$0x1]
    %v161 = vld [vmem:[#allocation5 + $0xa] sm:$0x1]
    %v162 = vld [vmem:[#allocation5 + $0xb] sm:$0x1]
    %v163 = vld [vmem:[#allocation5 + $0xc] sm:$0x1]
    %v164 = vld [vmem:[#allocation5 + $0xd] sm:$0x1]
    %v165 = vld [vmem:[#allocation5 + $0xe] sm:$0x1]
    %v166 = vld [vmem:[#allocation5 + $0xf] sm:$0x1]
    %v167 = vld [vmem:[#allocation5 + $0x10] sm:$0x1]
    %v168 = vld [vmem:[#allocation5 + $0x11] sm:$0x1]
    %v169 = vld [vmem:[#allocation5 + $0x12] sm:$0x1]
    %v170 = vld [vmem:[#allocation5 + $0x13] sm:$0x1]
    %v171 = vld [vmem:[#allocation5 + $0x14] sm:$0x1]
    %v172 = vld [vmem:[#allocation5 + $0x15] sm:$0x1]
    %v173 = vld [vmem:[#allocation5 + $0x16] sm:$0x1]
    %v174 = vld [vmem:[#allocation2] sm:$0x3]
    %v175 = vld [vmem:[%s1] sm:$0xff]
    %v176 = vld [vmem:[%s1 + $0x8] sm:$0xff]
    %v177 = vld [vmem:[%s1 + $0x10] sm:$0xff]
    %v178 = vld [vmem:[%s1 + $0x18] sm:$0xff]
    %v179 = vld [vmem:[%s1 + $0x20] sm:$0xff]
    %v180 = vld [vmem:[%s1 + $0x28] sm:$0xff]
    %v181 = vld [vmem:[%s1 + $0x30] sm:$0xff]
    %v182 = vld [vmem:[%s1 + $0x38] sm:$0xff]
    %vm183 = vcmask 523264
    %v185 = vsel %vm183, %v174, 0
    %187 = vmatprep.subr.mxu0 0.0
    %188 = vmatpush1.msra.mxu0 %v175
    %189 = vmatprep.subr.mxu0 0.0
    %190 = vmatpush1.msra.mxu0 %v176
    %191 = vmatprep.subr.mxu0 0.0
    %192 = vmatpush1.msra.mxu0 %v177
    %193 = vmatprep.subr.mxu0 0.0
    %194 = vmatpush1.msra.mxu0 %v178
    %195 = vmatprep.subr.mxu0 0.0
    %196 = vmatpush1.msra.mxu0 %v179
    %197 = vmatprep.subr.mxu0 0.0
    %198 = vmatpush1.msra.mxu0 %v180
    %199 = vmatprep.subr.mxu0 0.0
    %200 = vmatpush1.msra.mxu0 %v181
    %201 = vmatprep.subr.mxu0 0.0
    %202 = vmatpush1.msra.mxu0 %v182
    %203 = vmatprep.subr.mxu0 0.0
    %204 = vmatpush1.msra.mxu0 0.0
    %205 = vmatprep.subr.mxu0 0.0
    %206 = vmatpush1.msra.mxu0 0.0
    %207 = vmatprep.subr.mxu0 0.0
    %208 = vmatpush1.msra.mxu0 0.0
    %209 = vmatprep.subr.mxu0 0.0
    %210 = vmatpush1.msra.mxu0 0.0
    %211 = vmatprep.subr.mxu0 0.0
    %212 = vmatpush1.msra.mxu0 0.0
    %213 = vmatprep.subr.mxu0 0.0
    %214 = vmatpush1.msra.mxu0 0.0
    %215 = vmatprep.subr.mxu0 0.0
    %216 = vmatpush1.msra.mxu0 0.0
    %217 = vmatprep.subr.mxu0 0.0
    %218 = vmatpush1.msra.mxu0 0.0
    %219 = vmatprep.subr.mxu0 0.0
    %220 = vmatpush1.msra.mxu0 0.0
    %221 = vmatprep.subr.mxu0 0.0
    %222 = vmatpush1.msra.mxu0 0.0
    %223 = vmatprep.subr.mxu0 0.0
    %224 = vmatpush1.msra.mxu0 0.0
    %225 = vmatprep.subr.mxu0 0.0
    %226 = vmatpush1.msra.mxu0 0.0
    %227 = vmatprep.subr.mxu0 0.0
    %228 = vmatpush1.msra.mxu0 0.0
    %229 = vmatprep.subr.mxu0 0.0
    %230 = vmatpush1.msra.mxu0 0.0
    %231 = vmatprep.subr.mxu0 0.0
    %232 = vmatpush1.msra.mxu0 0.0
    %233 = vmatprep.subr.mxu0 0.0
    %234 = vmatpush1.msra.mxu0 0.0
    %235 = vmatprep.subr.mxu0 0.0
    %236 = vmatpush1.msra.mxu0 0.0
    %237 = vmatprep.subr.mxu0 0.0
    %238 = vmatpush1.msra.mxu0 0.0
    %239 = vmatprep.subr.mxu0 0.0
    %240 = vmatpush1.msra.mxu0 0.0
    %241 = vmatprep.subr.mxu0 0.0
    %242 = vmatpush1.msra.mxu0 0.0
    %243 = vmatprep.subr.mxu0 0.0
    %244 = vmatpush1.msra.mxu0 0.0
    %245 = vmatprep.subr.mxu0 0.0
    %246 = vmatpush1.msra.mxu0 0.0
    %247 = vmatprep.subr.mxu0 0.0
    %248 = vmatpush1.msra.mxu0 0.0
    %249 = vmatprep.subr.mxu0 0.0
    %250 = vmatpush1.msra.mxu0 0.0
    %251 = vmatprep.mubr.f32.mxu0 0.0
    %252 = vmatmul.mubr.f32.gmra.mrb[0].mxu0 %v185
    %v253 = vpop.f32.mrb[0].mxu0
    %v254 = vadd.f32 0.0, %v253
    %v255 = vpop.f32.mrb[0].mxu0
    %256 = vdwg.mxu0
    %v257 = vmax.f32 %v254, 0.0
    %v258 = vld [vmem:[#allocation7] sm:$0xff]
    %v259 = vld [vmem:[#allocation7 + $0x8] sm:$0xff]
    %v260 = vld [vmem:[#allocation7 + $0x10] sm:$0xff]
    %v261 = vld [vmem:[#allocation7 + $0x18] sm:$0xff]
    %v262 = vlaneseq
    %v263 = vshrl.u32 %v262, 7
    %v264 = vsub.s32 0, %v263
    %v265 = vrot.slane %v151, %v264
    %vm266 = vcmask 261120
    %v268 = vsel %vm266, %v257, 0
    %270 = vmatprep.subr.mxu0 0.0
    %271 = vmatpush1.msra.mxu0 %v258
    %272 = vmatprep.subr.mxu0 0.0
    %273 = vmatpush1.msra.mxu0 %v259
    %274 = vmatprep.subr.mxu0 0.0
    %275 = vmatpush1.msra.mxu0 %v260
    %276 = vmatprep.subr.mxu0 0.0
    %277 = vmatpush1.msra.mxu0 %v261
    %278 = vmatprep.subr.mxu0 0.0
    %279 = vmatpush1.msra.mxu0 0.0
    %280 = vmatprep.subr.mxu0 0.0
    %281 = vmatpush1.msra.mxu0 0.0
    %282 = vmatprep.subr.mxu0 0.0
    %283 = vmatpush1.msra.mxu0 0.0
    %284 = vmatprep.subr.mxu0 0.0
    %285 = vmatpush1.msra.mxu0 0.0
    %286 = vmatprep.subr.mxu0 0.0
    %287 = vmatpush1.msra.mxu0 0.0
    %288 = vmatprep.subr.mxu0 0.0
    %289 = vmatpush1.msra.mxu0 0.0
    %290 = vmatprep.subr.mxu0 0.0
    %291 = vmatpush1.msra.mxu0 0.0
    %292 = vmatprep.subr.mxu0 0.0
    %293 = vmatpush1.msra.mxu0 0.0
    %294 = vmatprep.subr.mxu0 0.0
    %295 = vmatpush1.msra.mxu0 0.0
    %296 = vmatprep.subr.mxu0 0.0
    %297 = vmatpush1.msra.mxu0 0.0
    %298 = vmatprep.subr.mxu0 0.0
    %299 = vmatpush1.msra.mxu0 0.0
    %300 = vmatprep.subr.mxu0 0.0
    %301 = vmatpush1.msra.mxu0 0.0
    %302 = vmatprep.subr.mxu0 0.0
    %303 = vmatpush1.msra.mxu0 0.0
    %304 = vmatprep.subr.mxu0 0.0
    %305 = vmatpush1.msra.mxu0 0.0
    %306 = vmatprep.subr.mxu0 0.0
    %307 = vmatpush1.msra.mxu0 0.0
    %308 = vmatprep.subr.mxu0 0.0
    %309 = vmatpush1.msra.mxu0 0.0
    %310 = vmatprep.subr.mxu0 0.0
    %311 = vmatpush1.msra.mxu0 0.0
    %312 = vmatprep.subr.mxu0 0.0
    %313 = vmatpush1.msra.mxu0 0.0
    %314 = vmatprep.subr.mxu0 0.0
    %315 = vmatpush1.msra.mxu0 0.0
    %316 = vmatprep.subr.mxu0 0.0
    %317 = vmatpush1.msra.mxu0 0.0
    %318 = vmatprep.subr.mxu0 0.0
    %319 = vmatpush1.msra.mxu0 0.0
    %320 = vmatprep.subr.mxu0 0.0
    %321 = vmatpush1.msra.mxu0 0.0
    %322 = vmatprep.subr.mxu0 0.0
    %323 = vmatpush1.msra.mxu0 0.0
    %324 = vmatprep.subr.mxu0 0.0
    %325 = vmatpush1.msra.mxu0 0.0
    %326 = vmatprep.subr.mxu0 0.0
    %327 = vmatpush1.msra.mxu0 0.0
    %328 = vmatprep.subr.mxu0 0.0
    %329 = vmatpush1.msra.mxu0 0.0
    %330 = vmatprep.subr.mxu0 0.0
    %331 = vmatpush1.msra.mxu0 0.0
    %332 = vmatprep.subr.mxu0 0.0
    %333 = vmatpush1.msra.mxu0 0.0
    %334 = vmatprep.mubr.f32.mxu0 0.0
    %335 = vmatmul.mubr.f32.gmra.mrb[0].mxu0 %v268
    %v336 = vpop.f32.mrb[0].mxu0
    %v337 = vadd.f32 %v265, %v336
    %v338 = vpop.f32.mrb[0].mxu0
    %339 = vdwg.mxu0
    %v340 = vmax.f32 %v337, 0.0
    %s341 = scalar_lea.vmem [#allocation7], 32
    %v342 = vld [vmem:[%s341] sm:$0xff]
    %v343 = vld [vmem:[%s341 + $0x8] sm:$0xff]
    %v344 = vld [vmem:[%s341 + $0x10] sm:$0xff]
    %v345 = vld [vmem:[%s341 + $0x18] sm:$0xff]
    %v346 = vlaneseq
    %v347 = vshrl.u32 %v346, 7
    %v348 = vsub.s32 0, %v347
    %v349 = vrot.slane %v152, %v348
    %v351 = vsel %vm266, %v340, 0
    %353 = vmatprep.subr.mxu0 0.0
    %354 = vmatpush1.msra.mxu0 %v342
    %355 = vmatprep.subr.mxu0 0.0
    %356 = vmatpush1.msra.mxu0 %v343
    %357 = vmatprep.subr.mxu0 0.0
    %358 = vmatpush1.msra.mxu0 %v344
    %359 = vmatprep.subr.mxu0 0.0
    %360 = vmatpush1.msra.mxu0 %v345
    %361 = vmatprep.subr.mxu0 0.0
    %362 = vmatpush1.msra.mxu0 0.0
    %363 = vmatprep.subr.mxu0 0.0
    %364 = vmatpush1.msra.mxu0 0.0
    %365 = vmatprep.subr.mxu0 0.0
    %366 = vmatpush1.msra.mxu0 0.0
    %367 = vmatprep.subr.mxu0 0.0
    %368 = vmatpush1.msra.mxu0 0.0
    %369 = vmatprep.subr.mxu0 0.0
    %370 = vmatpush1.msra.mxu0 0.0
    %371 = vmatprep.subr.mxu0 0.0
    %372 = vmatpush1.msra.mxu0 0.0
    %373 = vmatprep.subr.mxu0 0.0
    %374 = vmatpush1.msra.mxu0 0.0
    %375 = vmatprep.subr.mxu0 0.0
    %376 = vmatpush1.msra.mxu0 0.0
    %377 = vmatprep.subr.mxu0 0.0
    %378 = vmatpush1.msra.mxu0 0.0
    %379 = vmatprep.subr.mxu0 0.0
    %380 = vmatpush1.msra.mxu0 0.0
    %381 = vmatprep.subr.mxu0 0.0
    %382 = vmatpush1.msra.mxu0 0.0
    %383 = vmatprep.subr.mxu0 0.0
    %384 = vmatpush1.msra.mxu0 0.0
    %385 = vmatprep.subr.mxu0 0.0
    %386 = vmatpush1.msra.mxu0 0.0
    %387 = vmatprep.subr.mxu0 0.0
    %388 = vmatpush1.msra.mxu0 0.0
    %389 = vmatprep.subr.mxu0 0.0
    %390 = vmatpush1.msra.mxu0 0.0
    %391 = vmatprep.subr.mxu0 0.0
    %392 = vmatpush1.msra.mxu0 0.0
    %393 = vmatprep.subr.mxu0 0.0
    %394 = vmatpush1.msra.mxu0 0.0
    %395 = vmatprep.subr.mxu0 0.0
    %396 = vmatpush1.msra.mxu0 0.0
    %397 = vmatprep.subr.mxu0 0.0
    %398 = vmatpush1.msra.mxu0 0.0
    %399 = vmatprep.subr.mxu0 0.0
    %400 = vmatpush1.msra.mxu0 0.0
    %401 = vmatprep.subr.mxu0 0.0
    %402 = vmatpush1.msra.mxu0 0.0
    %403 = vmatprep.subr.mxu0 0.0
    %404 = vmatpush1.msra.mxu0 0.0
    %405 = vmatprep.subr.mxu0 0.0
    %406 = vmatpush1.msra.mxu0 0.0
    %407 = vmatprep.subr.mxu0 0.0
    %408 = vmatpush1.msra.mxu0 0.0
    %409 = vmatprep.subr.mxu0 0.0
    %410 = vmatpush1.msra.mxu0 0.0
    %411 = vmatprep.subr.mxu0 0.0
    %412 = vmatpush1.msra.mxu0 0.0
    %413 = vmatprep.subr.mxu0 0.0
    %414 = vmatpush1.msra.mxu0 0.0
    %415 = vmatprep.subr.mxu0 0.0
    %416 = vmatpush1.msra.mxu0 0.0
    %417 = vmatprep.mubr.f32.mxu0 0.0
    %418 = vmatmul.mubr.f32.gmra.mrb[0].mxu0 %v351
    %v419 = vpop.f32.mrb[0].mxu0
    %v420 = vadd.f32 %v349, %v419
    %v421 = vpop.f32.mrb[0].mxu0
    %422 = vdwg.mxu0
    %v423 = vmax.f32 %v420, 0.0
    %v424 = vld [vmem:[%s3] sm:$0x1]
    %v425 = vld [vmem:[%s4] sm:$0xff]
    %v426 = vlaneseq
    %v427 = vshrl.u32 %v426, 7
    %v428 = vlaneseq
    %v429 = vshrl.u32 %v428, 7
    %v430 = vsub.s32 0, %v429
    %v431 = vrot.slane %v424, %v430
    %vm432 = vcmp.eq.s32.totalorder %v427, %v431
    %v433 = vsel %vm432, 1, 0
    %v434 = vcvt.s32.f32 %v433
    %v435 = vlaneseq
    %v436 = vand.u32 %v435, 127
    %437 = vset.pattern.permute.xlu0 0
    %438 = vperm.xlu0 %437, %v425
    %v439 = vpop.permute.xlu0 %438
    %vm440 = vcmp.eq.s32.totalorder %v436, %v439
    %v441 = vsel %vm440, 1, 0
    %v442 = vcvt.s32.f32 %v441
    %v443 = vsel %vm440, 0.0, -1e+30
    %vm444 = vcmask 58368
    %v445 = vsel %vm444, %v434, 0.0
    %446 = vadd.xlane.f32.xlu0 %v445
    %v447 = vpop.xlane.xlu0 %446
    %v448 = vrcp.pop %v447
    %v449 = vld [vmem:[%s5] sm:$0xff]
    %vm450 = vcmask 64512
    %v452 = vsel %vm450, %v434, 0
    %454 = vmatprep.subr.mxu0 0.0
    %455 = vmatpush1.msra.mxu0 %v449
    %456 = vmatprep.subr.mxu0 0.0
    %457 = vmatpush1.msra.mxu0 0.0
    %458 = vmatprep.subr.mxu0 0.0
    %459 = vmatpush1.msra.mxu0 0.0
    %460 = vmatprep.subr.mxu0 0.0
    %461 = vmatpush1.msra.mxu0 0.0
    %462 = vmatprep.subr.mxu0 0.0
    %463 = vmatpush1.msra.mxu0 0.0
    %464 = vmatprep.subr.mxu0 0.0
    %465 = vmatpush1.msra.mxu0 0.0
    %466 = vmatprep.subr.mxu0 0.0
    %467 = vmatpush1.msra.mxu0 0.0
    %468 = vmatprep.subr.mxu0 0.0
    %469 = vmatpush1.msra.mxu0 0.0
    %470 = vmatprep.subr.mxu0 0.0
    %471 = vmatpush1.msra.mxu0 0.0
    %472 = vmatprep.subr.mxu0 0.0
    %473 = vmatpush1.msra.mxu0 0.0
    %474 = vmatprep.subr.mxu0 0.0
    %475 = vmatpush1.msra.mxu0 0.0
    %476 = vmatprep.subr.mxu0 0.0
    %477 = vmatpush1.msra.mxu0 0.0
    %478 = vmatprep.subr.mxu0 0.0
    %479 = vmatpush1.msra.mxu0 0.0
    %480 = vmatprep.subr.mxu0 0.0
    %481 = vmatpush1.msra.mxu0 0.0
    %482 = vmatprep.subr.mxu0 0.0
    %483 = vmatpush1.msra.mxu0 0.0
    %484 = vmatprep.subr.mxu0 0.0
    %485 = vmatpush1.msra.mxu0 0.0
    %486 = vmatprep.subr.mxu0 0.0
    %487 = vmatpush1.msra.mxu0 0.0
    %488 = vmatprep.subr.mxu0 0.0
    %489 = vmatpush1.msra.mxu0 0.0
    %490 = vmatprep.subr.mxu0 0.0
    %491 = vmatpush1.msra.mxu0 0.0
    %492 = vmatprep.subr.mxu0 0.0
    %493 = vmatpush1.msra.mxu0 0.0
    %494 = vmatprep.subr.mxu0 0.0
    %495 = vmatpush1.msra.mxu0 0.0
    %496 = vmatprep.subr.mxu0 0.0
    %497 = vmatpush1.msra.mxu0 0.0
    %498 = vmatprep.subr.mxu0 0.0
    %499 = vmatpush1.msra.mxu0 0.0
    %500 = vmatprep.subr.mxu0 0.0
    %501 = vmatpush1.msra.mxu0 0.0
    %502 = vmatprep.subr.mxu0 0.0
    %503 = vmatpush1.msra.mxu0 0.0
    %504 = vmatprep.subr.mxu0 0.0
    %505 = vmatpush1.msra.mxu0 0.0
    %506 = vmatprep.subr.mxu0 0.0
    %507 = vmatpush1.msra.mxu0 0.0
    %508 = vmatprep.subr.mxu0 0.0
    %509 = vmatpush1.msra.mxu0 0.0
    %510 = vmatprep.subr.mxu0 0.0
    %511 = vmatpush1.msra.mxu0 0.0
    %512 = vmatprep.subr.mxu0 0.0
    %513 = vmatpush1.msra.mxu0 0.0
    %514 = vmatprep.subr.mxu0 0.0
    %515 = vmatpush1.msra.mxu0 0.0
    %516 = vmatprep.subr.mxu0 0.0
    %517 = vmatpush1.msra.mxu0 0.0
    %518 = vmatprep.mubr.f32.mxu0 0.0
    %519 = vmatmul.mubr.f32.gmra.mrb[0].mxu0 %v452
    %v520 = vpop.f32.mrb[0].mxu0
    %v521 = vadd.f32 0.0, %v520
    %v522 = vpop.f32.mrb[0].mxu0
    %523 = vdwg.mxu0
    %v524 = vmul.f32 %v521, %v448
    %v525 = vld [vmem:[%s2] sm:$0xf]
    %v526 = vld [vmem:[#allocation8] sm:$0xff]
    %v527 = vld [vmem:[#allocation8 + $0x8] sm:$0xff]
    %v528 = vld [vmem:[#allocation8 + $0x10] sm:$0xff]
    %v529 = vld [vmem:[#allocation8 + $0x18] sm:$0xff]
    %v530 = vlaneseq
    %v531 = vshrl.u32 %v530, 7
    %v532 = vsub.s32 0, %v531
    %v533 = vrot.slane %v155, %v532
    %v534 = vsub.f32 %v449, %v533
    %v535 = vadd.f32 %v156, 1e-05
    %v536 = vrsqrt.pop %v535
    %v537 = vlaneseq
    %v538 = vshrl.u32 %v537, 7
    %v539 = vsub.s32 0, %v538
    %v540 = vrot.slane %v536, %v539
    %v541 = vmul.f32 %v534, %v540
    %v542 = vlaneseq
    %v543 = vshrl.u32 %v542, 7
    %v544 = vsub.s32 0, %v543
    %v545 = vrot.slane %v153, %v544
    %v546 = vmul.f32 %v541, %v545
    %v547 = vlaneseq
    %v548 = vshrl.u32 %v547, 7
    %v549 = vsub.s32 0, %v548
    %v550 = vrot.slane %v154, %v549
    %v551 = vadd.f32 %v546, %v550
    %v552 = vpack.c.bf16 %v551, %v551
    %v554 = vsel %vm450, %v525, 0
    %vm556 = vcmask 1043456
    %v558 = vsel %vm556, %v552, 0
    %560 = vmatprep.subr.bf16.mxu0 0
    %561 = vmatpush1.bf16.msra.mxu0 %v558
    %562 = vmatprep.subr.bf16.mxu0 0
    %563 = vmatpush1.bf16.msra.mxu0 0
    %564 = vmatprep.subr.bf16.mxu0 0
    %565 = vmatpush1.bf16.msra.mxu0 0
    %566 = vmatprep.subr.bf16.mxu0 0
    %567 = vmatpush1.bf16.msra.mxu0 0
    %568 = vmatprep.subr.bf16.mxu0 0
    %569 = vmatpush1.bf16.msra.mxu0 0
    %570 = vmatprep.subr.bf16.mxu0 0
    %571 = vmatpush1.bf16.msra.mxu0 0
    %572 = vmatprep.subr.bf16.mxu0 0
    %573 = vmatpush1.bf16.msra.mxu0 0
    %574 = vmatprep.subr.bf16.mxu0 0
    %575 = vmatpush1.bf16.msra.mxu0 0
    %576 = vmatprep.subr.bf16.mxu0 0
    %577 = vmatpush1.bf16.msra.mxu0 0
    %578 = vmatprep.subr.bf16.mxu0 0
    %579 = vmatpush1.bf16.msra.mxu0 0
    %580 = vmatprep.subr.bf16.mxu0 0
    %581 = vmatpush1.bf16.msra.mxu0 0
    %582 = vmatprep.subr.bf16.mxu0 0
    %583 = vmatpush1.bf16.msra.mxu0 0
    %584 = vmatprep.subr.bf16.mxu0 0
    %585 = vmatpush1.bf16.msra.mxu0 0
    %586 = vmatprep.subr.bf16.mxu0 0
    %587 = vmatpush1.bf16.msra.mxu0 0
    %588 = vmatprep.subr.bf16.mxu0 0
    %589 = vmatpush1.bf16.msra.mxu0 0
    %590 = vmatprep.subr.bf16.mxu0 0
    %591 = vmatpush1.bf16.msra.mxu0 0
    %592 = vmatprep.mubr.bf16.mxu0 0
    %593 = vmatmul.mubr.bf16.gmra.mrb[0].mxu0 %v554
    %v594 = vpop.f32.mrb[0].mxu0
    %v595 = vadd.f32 0.0, %v594
    %v596 = vpop.f32.mrb[0].mxu0
    %v597 = vpop.f32.mrb[0].mxu0
    %v598 = vpop.f32.mrb[0].mxu0
    %599 = vdwg.mxu0
    %v600 = vlaneseq
    %v601 = vshrl.u32 %v600, 7
    %v602 = vsub.s32 0, %v601
    %v603 = vrot.slane %v157, %v602
    %v605 = vsel %vm266, %v595, 0
    %607 = vmatprep.subr.mxu0 0.0
    %608 = vmatpush1.msra.mxu0 %v526
    %609 = vmatprep.subr.mxu0 0.0
    %610 = vmatpush1.msra.mxu0 %v527
    %611 = vmatprep.subr.mxu0 0.0
    %612 = vmatpush1.msra.mxu0 %v528
    %613 = vmatprep.subr.mxu0 0.0
    %614 = vmatpush1.msra.mxu0 %v529
    %615 = vmatprep.subr.mxu0 0.0
    %616 = vmatpush1.msra.mxu0 0.0
    %617 = vmatprep.subr.mxu0 0.0
    %618 = vmatpush1.msra.mxu0 0.0
    %619 = vmatprep.subr.mxu0 0.0
    %620 = vmatpush1.msra.mxu0 0.0
    %621 = vmatprep.subr.mxu0 0.0
    %622 = vmatpush1.msra.mxu0 0.0
    %623 = vmatprep.subr.mxu0 0.0
    %624 = vmatpush1.msra.mxu0 0.0
    %625 = vmatprep.subr.mxu0 0.0
    %626 = vmatpush1.msra.mxu0 0.0
    %627 = vmatprep.subr.mxu0 0.0
    %628 = vmatpush1.msra.mxu0 0.0
    %629 = vmatprep.subr.mxu0 0.0
    %630 = vmatpush1.msra.mxu0 0.0
    %631 = vmatprep.subr.mxu0 0.0
    %632 = vmatpush1.msra.mxu0 0.0
    %633 = vmatprep.subr.mxu0 0.0
    %634 = vmatpush1.msra.mxu0 0.0
    %635 = vmatprep.subr.mxu0 0.0
    %636 = vmatpush1.msra.mxu0 0.0
    %637 = vmatprep.subr.mxu0 0.0
    %638 = vmatpush1.msra.mxu0 0.0
    %639 = vmatprep.subr.mxu0 0.0
    %640 = vmatpush1.msra.mxu0 0.0
    %641 = vmatprep.subr.mxu0 0.0
    %642 = vmatpush1.msra.mxu0 0.0
    %643 = vmatprep.subr.mxu0 0.0
    %644 = vmatpush1.msra.mxu0 0.0
    %645 = vmatprep.subr.mxu0 0.0
    %646 = vmatpush1.msra.mxu0 0.0
    %647 = vmatprep.subr.mxu0 0.0
    %648 = vmatpush1.msra.mxu0 0.0
    %649 = vmatprep.subr.mxu0 0.0
    %650 = vmatpush1.msra.mxu0 0.0
    %651 = vmatprep.subr.mxu0 0.0
    %652 = vmatpush1.msra.mxu0 0.0
    %653 = vmatprep.subr.mxu0 0.0
    %654 = vmatpush1.msra.mxu0 0.0
    %655 = vmatprep.subr.mxu0 0.0
    %656 = vmatpush1.msra.mxu0 0.0
    %657 = vmatprep.subr.mxu0 0.0
    %658 = vmatpush1.msra.mxu0 0.0
    %659 = vmatprep.subr.mxu0 0.0
    %660 = vmatpush1.msra.mxu0 0.0
    %661 = vmatprep.subr.mxu0 0.0
    %662 = vmatpush1.msra.mxu0 0.0
    %663 = vmatprep.subr.mxu0 0.0
    %664 = vmatpush1.msra.mxu0 0.0
    %665 = vmatprep.subr.mxu0 0.0
    %666 = vmatpush1.msra.mxu0 0.0
    %667 = vmatprep.subr.mxu0 0.0
    %668 = vmatpush1.msra.mxu0 0.0
    %669 = vmatprep.subr.mxu0 0.0
    %670 = vmatpush1.msra.mxu0 0.0
    %671 = vmatprep.mubr.f32.mxu0 0.0
    %672 = vmatmul.mubr.f32.gmra.mrb[0].mxu0 %v605
    %v673 = vpop.f32.mrb[0].mxu0
    %v674 = vadd.f32 %v603, %v673
    %v675 = vpop.f32.mrb[0].mxu0
    %676 = vdwg.mxu0
    %v677 = vmax.f32 %v674, 0.0
    %v678 = vadd.f32 %v449, %v677
    %v679 = vld [vmem:[#allocation10] sm:$0xff]
    %v680 = vld [vmem:[#allocation10 + $0x8] sm:$0xff]
    %v681 = vld [vmem:[#allocation10 + $0x10] sm:$0xff]
    %v682 = vld [vmem:[#allocation10 + $0x18] sm:$0xff]
    %v683 = vlaneseq
    %v684 = vshrl.u32 %v683, 7
    %v685 = vsub.s32 0, %v684
    %v686 = vrot.slane %v160, %v685
    %v687 = vsub.f32 %v678, %v686
    %v688 = vadd.f32 %v161, 1e-05
    %v689 = vrsqrt.pop %v688
    %v690 = vlaneseq
    %v691 = vshrl.u32 %v690, 7
    %v692 = vsub.s32 0, %v691
    %v693 = vrot.slane %v689, %v692
    %v694 = vmul.f32 %v687, %v693
    %v695 = vlaneseq
    %v696 = vshrl.u32 %v695, 7
    %v697 = vsub.s32 0, %v696
    %v698 = vrot.slane %v158, %v697
    %v699 = vmul.f32 %v694, %v698
    %v700 = vlaneseq
    %v701 = vshrl.u32 %v700, 7
    %v702 = vsub.s32 0, %v701
    %v703 = vrot.slane %v159, %v702
    %v704 = vadd.f32 %v699, %v703
    %v705 = vpack.c.bf16 %v704, %v704
    %v707 = vsel %vm556, %v705, 0
    %709 = vmatprep.subr.bf16.mxu0 0
    %710 = vmatpush1.bf16.msra.mxu0 %v707
    %711 = vmatprep.subr.bf16.mxu0 0
    %712 = vmatpush1.bf16.msra.mxu0 0
    %713 = vmatprep.subr.bf16.mxu0 0
    %714 = vmatpush1.bf16.msra.mxu0 0
    %715 = vmatprep.subr.bf16.mxu0 0
    %716 = vmatpush1.bf16.msra.mxu0 0
    %717 = vmatprep.subr.bf16.mxu0 0
    %718 = vmatpush1.bf16.msra.mxu0 0
    %719 = vmatprep.subr.bf16.mxu0 0
    %720 = vmatpush1.bf16.msra.mxu0 0
    %721 = vmatprep.subr.bf16.mxu0 0
    %722 = vmatpush1.bf16.msra.mxu0 0
    %723 = vmatprep.subr.bf16.mxu0 0
    %724 = vmatpush1.bf16.msra.mxu0 0
    %725 = vmatprep.subr.bf16.mxu0 0
    %726 = vmatpush1.bf16.msra.mxu0 0
    %727 = vmatprep.subr.bf16.mxu0 0
    %728 = vmatpush1.bf16.msra.mxu0 0
    %729 = vmatprep.subr.bf16.mxu0 0
    %730 = vmatpush1.bf16.msra.mxu0 0
    %731 = vmatprep.subr.bf16.mxu0 0
    %732 = vmatpush1.bf16.msra.mxu0 0
    %733 = vmatprep.subr.bf16.mxu0 0
    %734 = vmatpush1.bf16.msra.mxu0 0
    %735 = vmatprep.subr.bf16.mxu0 0
    %736 = vmatpush1.bf16.msra.mxu0 0
    %737 = vmatprep.subr.bf16.mxu0 0
    %738 = vmatpush1.bf16.msra.mxu0 0
    %739 = vmatprep.subr.bf16.mxu0 0
    %740 = vmatpush1.bf16.msra.mxu0 0
    %741 = vmatprep.mubr.bf16.mxu0 0
    %742 = vmatmul.mubr.bf16.gmra.mrb[0].mxu0 %v554
    %v743 = vpop.f32.mrb[0].mxu0
    %v744 = vadd.f32 0.0, %v743
    %v745 = vpop.f32.mrb[0].mxu0
    %v746 = vpop.f32.mrb[0].mxu0
    %v747 = vpop.f32.mrb[0].mxu0
    %748 = vdwg.mxu0
    %v749 = vlaneseq
    %v750 = vshrl.u32 %v749, 7
    %v751 = vsub.s32 0, %v750
    %v752 = vrot.slane %v162, %v751
    %v754 = vsel %vm266, %v744, 0
    %756 = vmatprep.subr.mxu0 0.0
    %757 = vmatpush1.msra.mxu0 %v679
    %758 = vmatprep.subr.mxu0 0.0
    %759 = vmatpush1.msra.mxu0 %v680
    %760 = vmatprep.subr.mxu0 0.0
    %761 = vmatpush1.msra.mxu0 %v681
    %762 = vmatprep.subr.mxu0 0.0
    %763 = vmatpush1.msra.mxu0 %v682
    %764 = vmatprep.subr.mxu0 0.0
    %765 = vmatpush1.msra.mxu0 0.0
    %766 = vmatprep.subr.mxu0 0.0
    %767 = vmatpush1.msra.mxu0 0.0
    %768 = vmatprep.subr.mxu0 0.0
    %769 = vmatpush1.msra.mxu0 0.0
    %770 = vmatprep.subr.mxu0 0.0
    %771 = vmatpush1.msra.mxu0 0.0
    %772 = vmatprep.subr.mxu0 0.0
    %773 = vmatpush1.msra.mxu0 0.0
    %774 = vmatprep.subr.mxu0 0.0
    %775 = vmatpush1.msra.mxu0 0.0
    %776 = vmatprep.subr.mxu0 0.0
    %777 = vmatpush1.msra.mxu0 0.0
    %778 = vmatprep.subr.mxu0 0.0
    %779 = vmatpush1.msra.mxu0 0.0
    %780 = vmatprep.subr.mxu0 0.0
    %781 = vmatpush1.msra.mxu0 0.0
    %782 = vmatprep.subr.mxu0 0.0
    %783 = vmatpush1.msra.mxu0 0.0
    %784 = vmatprep.subr.mxu0 0.0
    %785 = vmatpush1.msra.mxu0 0.0
    %786 = vmatprep.subr.mxu0 0.0
    %787 = vmatpush1.msra.mxu0 0.0
    %788 = vmatprep.subr.mxu0 0.0
    %789 = vmatpush1.msra.mxu0 0.0
    %790 = vmatprep.subr.mxu0 0.0
    %791 = vmatpush1.msra.mxu0 0.0
    %792 = vmatprep.subr.mxu0 0.0
    %793 = vmatpush1.msra.mxu0 0.0
    %794 = vmatprep.subr.mxu0 0.0
    %795 = vmatpush1.msra.mxu0 0.0
    %796 = vmatprep.subr.mxu0 0.0
    %797 = vmatpush1.msra.mxu0 0.0
    %798 = vmatprep.subr.mxu0 0.0
    %799 = vmatpush1.msra.mxu0 0.0
    %800 = vmatprep.subr.mxu0 0.0
    %801 = vmatpush1.msra.mxu0 0.0
    %802 = vmatprep.subr.mxu0 0.0
    %803 = vmatpush1.msra.mxu0 0.0
    %804 = vmatprep.subr.mxu0 0.0
    %805 = vmatpush1.msra.mxu0 0.0
    %806 = vmatprep.subr.mxu0 0.0
    %807 = vmatpush1.msra.mxu0 0.0
    %808 = vmatprep.subr.mxu0 0.0
    %809 = vmatpush1.msra.mxu0 0.0
    %810 = vmatprep.subr.mxu0 0.0
    %811 = vmatpush1.msra.mxu0 0.0
    %812 = vmatprep.subr.mxu0 0.0
    %813 = vmatpush1.msra.mxu0 0.0
    %814 = vmatprep.subr.mxu0 0.0
    %815 = vmatpush1.msra.mxu0 0.0
    %816 = vmatprep.subr.mxu0 0.0
    %817 = vmatpush1.msra.mxu0 0.0
    %818 = vmatprep.subr.mxu0 0.0
    %819 = vmatpush1.msra.mxu0 0.0
    %820 = vmatprep.mubr.f32.mxu0 0.0
    %821 = vmatmul.mubr.f32.gmra.mrb[0].mxu0 %v754
    %v822 = vpop.f32.mrb[0].mxu0
    %v823 = vadd.f32 %v752, %v822
    %v824 = vpop.f32.mrb[0].mxu0
    %825 = vdwg.mxu0
    %v826 = vmax.f32 %v823, 0.0
    %v827 = vadd.f32 %v678, %v826
    %vm828 = vcmask 15360
    %v830 = vsel %vm828, %v442, 0
    %vm832 = vcmask 1041408
    %v834 = vsel %vm832, %v423, 0
    %836 = vmatprep.subr.mxu0 0.0
    %837 = vmatpush1.msra.mxu0 %v834
    %838 = vmatprep.subr.mxu0 0.0
    %839 = vmatpush1.msra.mxu0 0.0
    %840 = vmatprep.subr.mxu0 0.0
    %841 = vmatpush1.msra.mxu0 0.0
    %842 = vmatprep.subr.mxu0 0.0
    %843 = vmatpush1.msra.mxu0 0.0
    %844 = vmatprep.subr.mxu0 0.0
    %845 = vmatpush1.msra.mxu0 0.0
    %846 = vmatprep.subr.mxu0 0.0
    %847 = vmatpush1.msra.mxu0 0.0
    %848 = vmatprep.subr.mxu0 0.0
    %849 = vmatpush1.msra.mxu0 0.0
    %850 = vmatprep.subr.mxu0 0.0
    %851 = vmatpush1.msra.mxu0 0.0
    %852 = vmatprep.subr.mxu0 0.0
    %853 = vmatpush1.msra.mxu0 0.0
    %854 = vmatprep.subr.mxu0 0.0
    %855 = vmatpush1.msra.mxu0 0.0
    %856 = vmatprep.subr.mxu0 0.0
    %857 = vmatpush1.msra.mxu0 0.0
    %858 = vmatprep.subr.mxu0 0.0
    %859 = vmatpush1.msra.mxu0 0.0
    %860 = vmatprep.subr.mxu0 0.0
    %861 = vmatpush1.msra.mxu0 0.0
    %862 = vmatprep.subr.mxu0 0.0
    %863 = vmatpush1.msra.mxu0 0.0
    %864 = vmatprep.subr.mxu0 0.0
    %865 = vmatpush1.msra.mxu0 0.0
    %866 = vmatprep.subr.mxu0 0.0
    %867 = vmatpush1.msra.mxu0 0.0
    %868 = vmatprep.subr.mxu0 0.0
    %869 = vmatpush1.msra.mxu0 0.0
    %870 = vmatprep.subr.mxu0 0.0
    %871 = vmatpush1.msra.mxu0 0.0
    %872 = vmatprep.subr.mxu0 0.0
    %873 = vmatpush1.msra.mxu0 0.0
    %874 = vmatprep.subr.mxu0 0.0
    %875 = vmatpush1.msra.mxu0 0.0
    %876 = vmatprep.subr.mxu0 0.0
    %877 = vmatpush1.msra.mxu0 0.0
    %878 = vmatprep.subr.mxu0 0.0
    %879 = vmatpush1.msra.mxu0 0.0
    %880 = vmatprep.subr.mxu0 0.0
    %881 = vmatpush1.msra.mxu0 0.0
    %882 = vmatprep.subr.mxu0 0.0
    %883 = vmatpush1.msra.mxu0 0.0
    %884 = vmatprep.subr.mxu0 0.0
    %885 = vmatpush1.msra.mxu0 0.0
    %886 = vmatprep.subr.mxu0 0.0
    %887 = vmatpush1.msra.mxu0 0.0
    %888 = vmatprep.subr.mxu0 0.0
    %889 = vmatpush1.msra.mxu0 0.0
    %890 = vmatprep.subr.mxu0 0.0
    %891 = vmatpush1.msra.mxu0 0.0
    %892 = vmatprep.subr.mxu0 0.0
    %893 = vmatpush1.msra.mxu0 0.0
    %894 = vmatprep.subr.mxu0 0.0
    %895 = vmatpush1.msra.mxu0 0.0
    %896 = vmatprep.subr.mxu0 0.0
    %897 = vmatpush1.msra.mxu0 0.0
    %898 = vmatprep.subr.mxu0 0.0
    %899 = vmatpush1.msra.mxu0 0.0
    %900 = vmatprep.mubr.f32.mxu0 0.0
    %901 = vmatmul.mubr.f32.gmra.mrb[0].mxu0 %v830
    %v902 = vpop.f32.mrb[0].mxu0
    %v903 = vadd.f32 0.0, %v902
    %v904 = vpop.f32.mrb[0].mxu0
    %905 = vdwg.mxu0
    %v906 = vld [vmem:[%s10] sm:$0xff]
    %v907 = vld [vmem:[%s10 + $0x8] sm:$0xff]
    %v908 = vld [vmem:[%s10 + $0x10] sm:$0xff]
    %v909 = vld [vmem:[%s10 + $0x18] sm:$0xff]
    %v911 = vsel %vm266, %v827, 0
    %913 = vmatprep.subr.mxu0 0.0
    %914 = vmatpush1.msra.mxu0 %v906
    %915 = vmatprep.subr.mxu0 0.0
    %916 = vmatpush1.msra.mxu0 %v907
    %917 = vmatprep.subr.mxu0 0.0
    %918 = vmatpush1.msra.mxu0 %v908
    %919 = vmatprep.subr.mxu0 0.0
    %920 = vmatpush1.msra.mxu0 %v909
    %921 = vmatprep.subr.mxu0 0.0
    %922 = vmatpush1.msra.mxu0 0.0
    %923 = vmatprep.subr.mxu0 0.0
    %924 = vmatpush1.msra.mxu0 0.0
    %925 = vmatprep.subr.mxu0 0.0
    %926 = vmatpush1.msra.mxu0 0.0
    %927 = vmatprep.subr.mxu0 0.0
    %928 = vmatpush1.msra.mxu0 0.0
    %929 = vmatprep.subr.mxu0 0.0
    %930 = vmatpush1.msra.mxu0 0.0
    %931 = vmatprep.subr.mxu0 0.0
    %932 = vmatpush1.msra.mxu0 0.0
    %933 = vmatprep.subr.mxu0 0.0
    %934 = vmatpush1.msra.mxu0 0.0
    %935 = vmatprep.subr.mxu0 0.0
    %936 = vmatpush1.msra.mxu0 0.0
    %937 = vmatprep.subr.mxu0 0.0
    %938 = vmatpush1.msra.mxu0 0.0
    %939 = vmatprep.subr.mxu0 0.0
    %940 = vmatpush1.msra.mxu0 0.0
    %941 = vmatprep.subr.mxu0 0.0
    %942 = vmatpush1.msra.mxu0 0.0
    %943 = vmatprep.subr.mxu0 0.0
    %944 = vmatpush1.msra.mxu0 0.0
    %945 = vmatprep.subr.mxu0 0.0
    %946 = vmatpush1.msra.mxu0 0.0
    %947 = vmatprep.subr.mxu0 0.0
    %948 = vmatpush1.msra.mxu0 0.0
    %949 = vmatprep.subr.mxu0 0.0
    %950 = vmatpush1.msra.mxu0 0.0
    %951 = vmatprep.subr.mxu0 0.0
    %952 = vmatpush1.msra.mxu0 0.0
    %953 = vmatprep.subr.mxu0 0.0
    %954 = vmatpush1.msra.mxu0 0.0
    %955 = vmatprep.subr.mxu0 0.0
    %956 = vmatpush1.msra.mxu0 0.0
    %957 = vmatprep.subr.mxu0 0.0
    %958 = vmatpush1.msra.mxu0 0.0
    %959 = vmatprep.subr.mxu0 0.0
    %960 = vmatpush1.msra.mxu0 0.0
    %961 = vmatprep.subr.mxu0 0.0
    %962 = vmatpush1.msra.mxu0 0.0
    %963 = vmatprep.subr.mxu0 0.0
    %964 = vmatpush1.msra.mxu0 0.0
    %965 = vmatprep.subr.mxu0 0.0
    %966 = vmatpush1.msra.mxu0 0.0
    %967 = vmatprep.subr.mxu0 0.0
    %968 = vmatpush1.msra.mxu0 0.0
    %969 = vmatprep.subr.mxu0 0.0
    %970 = vmatpush1.msra.mxu0 0.0
    %971 = vmatprep.subr.mxu0 0.0
    %972 = vmatpush1.msra.mxu0 0.0
    %973 = vmatprep.subr.mxu0 0.0
    %974 = vmatpush1.msra.mxu0 0.0
    %975 = vmatprep.subr.mxu0 0.0
    %976 = vmatpush1.msra.mxu0 0.0
    %977 = vmatprep.mubr.f32.mxu0 0.0
    %978 = vmatmul.mubr.f32.gmra.mrb[0].mxu0 %v911
    %v979 = vpop.f32.mrb[0].mxu0
    %v980 = vadd.f32 0.0, %v979
    %v981 = vpop.f32.mrb[0].mxu0
    %982 = vdwg.mxu0
    %s983 = scalar_lea.vmem %s10, 32
    %v984 = vld [vmem:[%s983] sm:$0xff]
    %v985 = vld [vmem:[%s983 + $0x8] sm:$0xff]
    %v986 = vld [vmem:[%s983 + $0x10] sm:$0xff]
    %v987 = vld [vmem:[%s983 + $0x18] sm:$0xff]
    %v989 = vsel %vm266, %v903, 0
    %991 = vmatprep.subr.mxu0 0.0
    %992 = vmatpush1.msra.mxu0 %v984
    %993 = vmatprep.subr.mxu0 0.0
    %994 = vmatpush1.msra.mxu0 %v985
    %995 = vmatprep.subr.mxu0 0.0
    %996 = vmatpush1.msra.mxu0 %v986
    %997 = vmatprep.subr.mxu0 0.0
    %998 = vmatpush1.msra.mxu0 %v987
    %999 = vmatprep.subr.mxu0 0.0
    %1000 = vmatpush1.msra.mxu0 0.0
    %1001 = vmatprep.subr.mxu0 0.0
    %1002 = vmatpush1.msra.mxu0 0.0
    %1003 = vmatprep.subr.mxu0 0.0
    %1004 = vmatpush1.msra.mxu0 0.0
    %1005 = vmatprep.subr.mxu0 0.0
    %1006 = vmatpush1.msra.mxu0 0.0
    %1007 = vmatprep.subr.mxu0 0.0
    %1008 = vmatpush1.msra.mxu0 0.0
    %1009 = vmatprep.subr.mxu0 0.0
    %1010 = vmatpush1.msra.mxu0 0.0
    %1011 = vmatprep.subr.mxu0 0.0
    %1012 = vmatpush1.msra.mxu0 0.0
    %1013 = vmatprep.subr.mxu0 0.0
    %1014 = vmatpush1.msra.mxu0 0.0
    %1015 = vmatprep.subr.mxu0 0.0
    %1016 = vmatpush1.msra.mxu0 0.0
    %1017 = vmatprep.subr.mxu0 0.0
    %1018 = vmatpush1.msra.mxu0 0.0
    %1019 = vmatprep.subr.mxu0 0.0
    %1020 = vmatpush1.msra.mxu0 0.0
    %1021 = vmatprep.subr.mxu0 0.0
    %1022 = vmatpush1.msra.mxu0 0.0
    %1023 = vmatprep.subr.mxu0 0.0
    %1024 = vmatpush1.msra.mxu0 0.0
    %1025 = vmatprep.subr.mxu0 0.0
    %1026 = vmatpush1.msra.mxu0 0.0
    %1027 = vmatprep.subr.mxu0 0.0
    %1028 = vmatpush1.msra.mxu0 0.0
    %1029 = vmatprep.subr.mxu0 0.0
    %1030 = vmatpush1.msra.mxu0 0.0
    %1031 = vmatprep.subr.mxu0 0.0
    %1032 = vmatpush1.msra.mxu0 0.0
    %1033 = vmatprep.subr.mxu0 0.0
    %1034 = vmatpush1.msra.mxu0 0.0
    %1035 = vmatprep.subr.mxu0 0.0
    %1036 = vmatpush1.msra.mxu0 0.0
    %1037 = vmatprep.subr.mxu0 0.0
    %1038 = vmatpush1.msra.mxu0 0.0
    %1039 = vmatprep.subr.mxu0 0.0
    %1040 = vmatpush1.msra.mxu0 0.0
    %1041 = vmatprep.subr.mxu0 0.0
    %1042 = vmatpush1.msra.mxu0 0.0
    %1043 = vmatprep.subr.mxu0 0.0
    %1044 = vmatpush1.msra.mxu0 0.0
    %1045 = vmatprep.subr.mxu0 0.0
    %1046 = vmatpush1.msra.mxu0 0.0
    %1047 = vmatprep.subr.mxu0 0.0
    %1048 = vmatpush1.msra.mxu0 0.0
    %1049 = vmatprep.subr.mxu0 0.0
    %1050 = vmatpush1.msra.mxu0 0.0
    %1051 = vmatprep.subr.mxu0 0.0
    %1052 = vmatpush1.msra.mxu0 0.0
    %1053 = vmatprep.subr.mxu0 0.0
    %1054 = vmatpush1.msra.mxu0 0.0
    %1055 = vmatprep.mubr.f32.mxu0 0.0
    %1056 = vmatmul.mubr.f32.gmra.mrb[0].mxu0 %v989
    %v1057 = vpop.f32.mrb[0].mxu0
    %v1058 = vadd.f32 0.0, %v1057
    %v1059 = vpop.f32.mrb[0].mxu0
    %1060 = vdwg.mxu0
    %s1061 = scalar_lea.vmem %s10, 64
    %v1062 = vld [vmem:[%s1061] sm:$0xff]
    %v1063 = vld [vmem:[%s1061 + $0x8] sm:$0xff]
    %v1064 = vld [vmem:[%s1061 + $0x10] sm:$0xff]
    %v1065 = vld [vmem:[%s1061 + $0x18] sm:$0xff]
    %1066 = vmatprep.subr.mxu0 0.0
    %1067 = vmatpush1.msra.mxu0 %v1062
    %1068 = vmatprep.subr.mxu0 0.0
    %1069 = vmatpush1.msra.mxu0 %v1063
    %1070 = vmatprep.subr.mxu0 0.0
    %1071 = vmatpush1.msra.mxu0 %v1064
    %1072 = vmatprep.subr.mxu0 0.0
    %1073 = vmatpush1.msra.mxu0 %v1065
    %1074 = vmatprep.subr.mxu0 0.0
    %1075 = vmatpush1.msra.mxu0 0.0
    %1076 = vmatprep.subr.mxu0 0.0
    %1077 = vmatpush1.msra.mxu0 0.0
    %1078 = vmatprep.subr.mxu0 0.0
    %1079 = vmatpush1.msra.mxu0 0.0
    %1080 = vmatprep.subr.mxu0 0.0
    %1081 = vmatpush1.msra.mxu0 0.0
    %1082 = vmatprep.subr.mxu0 0.0
    %1083 = vmatpush1.msra.mxu0 0.0
    %1084 = vmatprep.subr.mxu0 0.0
    %1085 = vmatpush1.msra.mxu0 0.0
    %1086 = vmatprep.subr.mxu0 0.0
    %1087 = vmatpush1.msra.mxu0 0.0
    %1088 = vmatprep.subr.mxu0 0.0
    %1089 = vmatpush1.msra.mxu0 0.0
    %1090 = vmatprep.subr.mxu0 0.0
    %1091 = vmatpush1.msra.mxu0 0.0
    %1092 = vmatprep.subr.mxu0 0.0
    %1093 = vmatpush1.msra.mxu0 0.0
    %1094 = vmatprep.subr.mxu0 0.0
    %1095 = vmatpush1.msra.mxu0 0.0
    %1096 = vmatprep.subr.mxu0 0.0
    %1097 = vmatpush1.msra.mxu0 0.0
    %1098 = vmatprep.subr.mxu0 0.0
    %1099 = vmatpush1.msra.mxu0 0.0
    %1100 = vmatprep.subr.mxu0 0.0
    %1101 = vmatpush1.msra.mxu0 0.0
    %1102 = vmatprep.subr.mxu0 0.0
    %1103 = vmatpush1.msra.mxu0 0.0
    %1104 = vmatprep.subr.mxu0 0.0
    %1105 = vmatpush1.msra.mxu0 0.0
    %1106 = vmatprep.subr.mxu0 0.0
    %1107 = vmatpush1.msra.mxu0 0.0
    %1108 = vmatprep.subr.mxu0 0.0
    %1109 = vmatpush1.msra.mxu0 0.0
    %1110 = vmatprep.subr.mxu0 0.0
    %1111 = vmatpush1.msra.mxu0 0.0
    %1112 = vmatprep.subr.mxu0 0.0
    %1113 = vmatpush1.msra.mxu0 0.0
    %1114 = vmatprep.subr.mxu0 0.0
    %1115 = vmatpush1.msra.mxu0 0.0
    %1116 = vmatprep.subr.mxu0 0.0
    %1117 = vmatpush1.msra.mxu0 0.0
    %1118 = vmatprep.subr.mxu0 0.0
    %1119 = vmatpush1.msra.mxu0 0.0
    %1120 = vmatprep.subr.mxu0 0.0
    %1121 = vmatpush1.msra.mxu0 0.0
    %1122 = vmatprep.subr.mxu0 0.0
    %1123 = vmatpush1.msra.mxu0 0.0
    %1124 = vmatprep.subr.mxu0 0.0
    %1125 = vmatpush1.msra.mxu0 0.0
    %1126 = vmatprep.subr.mxu0 0.0
    %1127 = vmatpush1.msra.mxu0 0.0
    %1128 = vmatprep.subr.mxu0 0.0
    %1129 = vmatpush1.msra.mxu0 0.0
    %1130 = vmatprep.mubr.f32.mxu0 0.0
    %1131 = vmatmul.mubr.f32.gmra.mrb[0].mxu0 %v911
    %v1132 = vpop.f32.mrb[0].mxu0
    %v1133 = vadd.f32 0.0, %v1132
    %v1134 = vpop.f32.mrb[0].mxu0
    %1135 = vdwg.mxu0
    %v1136 = vmul.f32 %v980, %v1058
    %v1137 = vmul.f32 %v1136, 0.02795085
    %v1138 = vsel %vm266, %v1137, 0.0
    %1139 = vadd.xlane.f32.xlu0 %v1138
    %v1140 = vpop.xlane.xlu0 %1139
    %1142 = vrot.lane.b32.xlu0 %v1137, 96
    %v1143 = vpop.permute.xlu0 %1142
    %v1145 = vsel %vm266, %v1143, 0.0
    %1146 = vadd.xlane.f32.xlu0 %v1145
    %v1147 = vpop.xlane.xlu0 %1146
    %v1148 = vadd.f32 %v1140, %v443
    %v1149 = vadd.f32 %v1147, %v443
    %1151 = vrot.lane.b32.xlu0 %v1149, 2
    %v1152 = vpop.permute.xlu0 %1151
    %v1154 = vsel %vm828, %v1148, %v1152
    %vm1155 = vcmask 31744
    %v1156 = vsel %vm1155, %v1154, -inf
    %v1157 = vrot.slane %v1156, 4
    %v1158 = vmax.f32 %v1156, %v1157
    %v1159 = vrot.slane %v1158, 2
    %v1160 = vmax.f32 %v1158, %v1159
    %v1161 = vrot.slane %v1160, 1
    %v1162 = vmax.f32 %v1160, %v1161
    %v1163 = vsub.f32 %v1154, %v1162
    %v1164 = vmul.f32 %v1163, 1.442695
    %v1165 = vpow.pop %v1164
    %v1166 = vsel %vm1155, %v1165, 0.0
    %v1167 = vrot.slane %v1166, 4
    %v1168 = vadd.f32 %v1166, %v1167
    %v1169 = vrot.slane %v1168, 2
    %v1170 = vadd.f32 %v1168, %v1169
    %v1171 = vrot.slane %v1170, 1
    %v1172 = vadd.f32 %v1170, %v1171
    %v1173 = vrcp.pop %v1172
    %v1174 = vmul.f32 %v1165, %v1173
    %v1175 = vsel %vm828, %v1174, 0.0
    %1176 = vadd.xlane.f32.xlu0 %v1175
    %v1177 = vpop.xlane.xlu0 %1176
    %v1178 = vmul.f32 %v1133, %v1177
    %1180 = vrot.lane.b32.xlu0 %v1174, 126
    %v1181 = vpop.permute.xlu0 %1180
    %v1183 = vsel %vm828, %v1181, 0.0
    %1184 = vadd.xlane.f32.xlu0 %v1183
    %v1185 = vpop.xlane.xlu0 %1184
    %v1186 = vmul.f32 %v1133, %v1185
    %v1187 = vsel %vm266, %v1178, %v1186
    %v1188 = vld [vmem:[%s11] sm:$0xff]
    %v1189 = vld [vmem:[%s11 + $0x8] sm:$0xff]
    %v1190 = vld [vmem:[%s11 + $0x10] sm:$0xff]
    %v1191 = vld [vmem:[%s11 + $0x18] sm:$0xff]
    %v1192 = vld [vmem:[%s11 + $0x20] sm:$0xff]
    %v1193 = vld [vmem:[%s11 + $0x28] sm:$0xff]
    %v1194 = vld [vmem:[%s11 + $0x30] sm:$0xff]
    %v1195 = vld [vmem:[%s11 + $0x38] sm:$0xff]
    %v1197 = vsel %vm183, %v1187, 0
    %1199 = vmatprep.subr.mxu0 0.0
    %1200 = vmatpush1.msra.mxu0 %v1188
    %1201 = vmatprep.subr.mxu0 0.0
    %1202 = vmatpush1.msra.mxu0 %v1189
    %1203 = vmatprep.subr.mxu0 0.0
    %1204 = vmatpush1.msra.mxu0 %v1190
    %1205 = vmatprep.subr.mxu0 0.0
    %1206 = vmatpush1.msra.mxu0 %v1191
    %1207 = vmatprep.subr.mxu0 0.0
    %1208 = vmatpush1.msra.mxu0 %v1192
    %1209 = vmatprep.subr.mxu0 0.0
    %1210 = vmatpush1.msra.mxu0 %v1193
    %1211 = vmatprep.subr.mxu0 0.0
    %1212 = vmatpush1.msra.mxu0 %v1194
    %1213 = vmatprep.subr.mxu0 0.0
    %1214 = vmatpush1.msra.mxu0 %v1195
    %1215 = vmatprep.subr.mxu0 0.0
    %1216 = vmatpush1.msra.mxu0 0.0
    %1217 = vmatprep.subr.mxu0 0.0
    %1218 = vmatpush1.msra.mxu0 0.0
    %1219 = vmatprep.subr.mxu0 0.0
    %1220 = vmatpush1.msra.mxu0 0.0
    %1221 = vmatprep.subr.mxu0 0.0
    %1222 = vmatpush1.msra.mxu0 0.0
    %1223 = vmatprep.subr.mxu0 0.0
    %1224 = vmatpush1.msra.mxu0 0.0
    %1225 = vmatprep.subr.mxu0 0.0
    %1226 = vmatpush1.msra.mxu0 0.0
    %1227 = vmatprep.subr.mxu0 0.0
    %1228 = vmatpush1.msra.mxu0 0.0
    %1229 = vmatprep.subr.mxu0 0.0
    %1230 = vmatpush1.msra.mxu0 0.0
    %1231 = vmatprep.subr.mxu0 0.0
    %1232 = vmatpush1.msra.mxu0 0.0
    %1233 = vmatprep.subr.mxu0 0.0
    %1234 = vmatpush1.msra.mxu0 0.0
    %1235 = vmatprep.subr.mxu0 0.0
    %1236 = vmatpush1.msra.mxu0 0.0
    %1237 = vmatprep.subr.mxu0 0.0
    %1238 = vmatpush1.msra.mxu0 0.0
    %1239 = vmatprep.subr.mxu0 0.0
    %1240 = vmatpush1.msra.mxu0 0.0
    %1241 = vmatprep.subr.mxu0 0.0
    %1242 = vmatpush1.msra.mxu0 0.0
    %1243 = vmatprep.subr.mxu0 0.0
    %1244 = vmatpush1.msra.mxu0 0.0
    %1245 = vmatprep.subr.mxu0 0.0
    %1246 = vmatpush1.msra.mxu0 0.0
    %1247 = vmatprep.subr.mxu0 0.0
    %1248 = vmatpush1.msra.mxu0 0.0
    %1249 = vmatprep.subr.mxu0 0.0
    %1250 = vmatpush1.msra.mxu0 0.0
    %1251 = vmatprep.subr.mxu0 0.0
    %1252 = vmatpush1.msra.mxu0 0.0
    %1253 = vmatprep.subr.mxu0 0.0
    %1254 = vmatpush1.msra.mxu0 0.0
    %1255 = vmatprep.subr.mxu0 0.0
    %1256 = vmatpush1.msra.mxu0 0.0
    %1257 = vmatprep.subr.mxu0 0.0
    %1258 = vmatpush1.msra.mxu0 0.0
    %1259 = vmatprep.subr.mxu0 0.0
    %1260 = vmatpush1.msra.mxu0 0.0
    %1261 = vmatprep.subr.mxu0 0.0
    %1262 = vmatpush1.msra.mxu0 0.0
    %1263 = vmatprep.mubr.f32.mxu0 0.0
    %1264 = vmatmul.mubr.f32.gmra.mrb[0].mxu0 %v1197
    %v1265 = vpop.f32.mrb[0].mxu0
    %v1266 = vadd.f32 %v827, %v1265
    %v1267 = vpop.f32.mrb[0].mxu0
    %1268 = vdwg.mxu0
    %v1269 = vsel %vm266, %v1266, 0.0
    %1270 = vadd.xlane.f32.xlu0 %v1269
    %v1271 = vpop.xlane.xlu0 %1270
    %v1272 = vrcp.pop 32.0
    %v1273 = vmul.f32 %v1271, %v1272
    %v1274 = vsub.f32 %v1266, %v1273
    %v1275 = vmul.f32 %v1274, %v1274
    %v1276 = vsel %vm266, %v1275, 0.0
    %1277 = vadd.xlane.f32.xlu0 %v1276
    %v1278 = vpop.xlane.xlu0 %1277
    %v1279 = vmul.f32 %v1278, %v1272
    %v1280 = vadd.f32 %v1279, 1e-05
    %v1281 = vrsqrt.pop %v1280
    %v1282 = vmul.f32 %v1274, %v1281
    %v1283 = vlaneseq
    %v1284 = vshrl.u32 %v1283, 7
    %v1285 = vsub.s32 0, %v1284
    %v1286 = vrot.slane %v165, %v1285
    %v1287 = vmul.f32 %v1282, %v1286
    %v1288 = vlaneseq
    %v1289 = vshrl.u32 %v1288, 7
    %v1290 = vsub.s32 0, %v1289
    %v1291 = vrot.slane %v166, %v1290
    %v1292 = vadd.f32 %v1287, %v1291
    %v1293 = vld [vmem:[#allocation11] sm:$0xff]
    %v1294 = vld [vmem:[#allocation11 + $0x8] sm:$0xff]
    %v1295 = vld [vmem:[#allocation11 + $0x10] sm:$0xff]
    %v1296 = vld [vmem:[#allocation11 + $0x18] sm:$0xff]
    %v1297 = vlaneseq
    %v1298 = vshrl.u32 %v1297, 7
    %v1299 = vsub.s32 0, %v1298
    %v1300 = vrot.slane %v163, %v1299
    %v1302 = vsel %vm266, %v1292, 0
    %1304 = vmatprep.subr.mxu0 0.0
    %1305 = vmatpush1.msra.mxu0 %v1293
    %1306 = vmatprep.subr.mxu0 0.0
    %1307 = vmatpush1.msra.mxu0 %v1294
    %1308 = vmatprep.subr.mxu0 0.0
    %1309 = vmatpush1.msra.mxu0 %v1295
    %1310 = vmatprep.subr.mxu0 0.0
    %1311 = vmatpush1.msra.mxu0 %v1296
    %1312 = vmatprep.subr.mxu0 0.0
    %1313 = vmatpush1.msra.mxu0 0.0
    %1314 = vmatprep.subr.mxu0 0.0
    %1315 = vmatpush1.msra.mxu0 0.0
    %1316 = vmatprep.subr.mxu0 0.0
    %1317 = vmatpush1.msra.mxu0 0.0
    %1318 = vmatprep.subr.mxu0 0.0
    %1319 = vmatpush1.msra.mxu0 0.0
    %1320 = vmatprep.subr.mxu0 0.0
    %1321 = vmatpush1.msra.mxu0 0.0
    %1322 = vmatprep.subr.mxu0 0.0
    %1323 = vmatpush1.msra.mxu0 0.0
    %1324 = vmatprep.subr.mxu0 0.0
    %1325 = vmatpush1.msra.mxu0 0.0
    %1326 = vmatprep.subr.mxu0 0.0
    %1327 = vmatpush1.msra.mxu0 0.0
    %1328 = vmatprep.subr.mxu0 0.0
    %1329 = vmatpush1.msra.mxu0 0.0
    %1330 = vmatprep.subr.mxu0 0.0
    %1331 = vmatpush1.msra.mxu0 0.0
    %1332 = vmatprep.subr.mxu0 0.0
    %1333 = vmatpush1.msra.mxu0 0.0
    %1334 = vmatprep.subr.mxu0 0.0
    %1335 = vmatpush1.msra.mxu0 0.0
    %1336 = vmatprep.subr.mxu0 0.0
    %1337 = vmatpush1.msra.mxu0 0.0
    %1338 = vmatprep.subr.mxu0 0.0
    %1339 = vmatpush1.msra.mxu0 0.0
    %1340 = vmatprep.subr.mxu0 0.0
    %1341 = vmatpush1.msra.mxu0 0.0
    %1342 = vmatprep.subr.mxu0 0.0
    %1343 = vmatpush1.msra.mxu0 0.0
    %1344 = vmatprep.subr.mxu0 0.0
    %1345 = vmatpush1.msra.mxu0 0.0
    %1346 = vmatprep.subr.mxu0 0.0
    %1347 = vmatpush1.msra.mxu0 0.0
    %1348 = vmatprep.subr.mxu0 0.0
    %1349 = vmatpush1.msra.mxu0 0.0
    %1350 = vmatprep.subr.mxu0 0.0
    %1351 = vmatpush1.msra.mxu0 0.0
    %1352 = vmatprep.subr.mxu0 0.0
    %1353 = vmatpush1.msra.mxu0 0.0
    %1354 = vmatprep.subr.mxu0 0.0
    %1355 = vmatpush1.msra.mxu0 0.0
    %1356 = vmatprep.subr.mxu0 0.0
    %1357 = vmatpush1.msra.mxu0 0.0
    %1358 = vmatprep.subr.mxu0 0.0
    %1359 = vmatpush1.msra.mxu0 0.0
    %1360 = vmatprep.subr.mxu0 0.0
    %1361 = vmatpush1.msra.mxu0 0.0
    %1362 = vmatprep.subr.mxu0 0.0
    %1363 = vmatpush1.msra.mxu0 0.0
    %1364 = vmatprep.subr.mxu0 0.0
    %1365 = vmatpush1.msra.mxu0 0.0
    %1366 = vmatprep.subr.mxu0 0.0
    %1367 = vmatpush1.msra.mxu0 0.0
    %1368 = vmatprep.mubr.f32.mxu0 0.0
    %1369 = vmatmul.mubr.f32.gmra.mrb[0].mxu0 %v1302
    %v1370 = vpop.f32.mrb[0].mxu0
    %v1371 = vadd.f32 %v1300, %v1370
    %v1372 = vpop.f32.mrb[0].mxu0
    %1373 = vdwg.mxu0
    %v1374 = vmax.f32 %v1371, 0.0
    %v1375 = vld [vmem:[%s13] sm:$0xff]
    %v1376 = vld [vmem:[%s13 + $0x8] sm:$0xff]
    %v1377 = vld [vmem:[%s13 + $0x10] sm:$0xff]
    %v1378 = vld [vmem:[%s13 + $0x18] sm:$0xff]
    %v1379 = vld [vmem:[%s13 + $0x20] sm:$0xff]
    %v1380 = vld [vmem:[%s13 + $0x28] sm:$0xff]
    %v1381 = vld [vmem:[%s13 + $0x30] sm:$0xff]
    %v1382 = vld [vmem:[%s13 + $0x38] sm:$0xff]
    %v1383 = vlaneseq
    %v1384 = vshrl.u32 %v1383, 7
    %v1385 = vsub.s32 0, %v1384
    %v1386 = vrot.slane %v164, %v1385
    %v1388 = vsel %vm183, %v1374, 0
    %1390 = vmatprep.subr.mxu0 0.0
    %1391 = vmatpush1.msra.mxu0 %v1375
    %1392 = vmatprep.subr.mxu0 0.0
    %1393 = vmatpush1.msra.mxu0 %v1376
    %1394 = vmatprep.subr.mxu0 0.0
    %1395 = vmatpush1.msra.mxu0 %v1377
    %1396 = vmatprep.subr.mxu0 0.0
    %1397 = vmatpush1.msra.mxu0 %v1378
    %1398 = vmatprep.subr.mxu0 0.0
    %1399 = vmatpush1.msra.mxu0 %v1379
    %1400 = vmatprep.subr.mxu0 0.0
    %1401 = vmatpush1.msra.mxu0 %v1380
    %1402 = vmatprep.subr.mxu0 0.0
    %1403 = vmatpush1.msra.mxu0 %v1381
    %1404 = vmatprep.subr.mxu0 0.0
    %1405 = vmatpush1.msra.mxu0 %v1382
    %1406 = vmatprep.subr.mxu0 0.0
    %1407 = vmatpush1.msra.mxu0 0.0
    %1408 = vmatprep.subr.mxu0 0.0
    %1409 = vmatpush1.msra.mxu0 0.0
    %1410 = vmatprep.subr.mxu0 0.0
    %1411 = vmatpush1.msra.mxu0 0.0
    %1412 = vmatprep.subr.mxu0 0.0
    %1413 = vmatpush1.msra.mxu0 0.0
    %1414 = vmatprep.subr.mxu0 0.0
    %1415 = vmatpush1.msra.mxu0 0.0
    %1416 = vmatprep.subr.mxu0 0.0
    %1417 = vmatpush1.msra.mxu0 0.0
    %1418 = vmatprep.subr.mxu0 0.0
    %1419 = vmatpush1.msra.mxu0 0.0
    %1420 = vmatprep.subr.mxu0 0.0
    %1421 = vmatpush1.msra.mxu0 0.0
    %1422 = vmatprep.subr.mxu0 0.0
    %1423 = vmatpush1.msra.mxu0 0.0
    %1424 = vmatprep.subr.mxu0 0.0
    %1425 = vmatpush1.msra.mxu0 0.0
    %1426 = vmatprep.subr.mxu0 0.0
    %1427 = vmatpush1.msra.mxu0 0.0
    %1428 = vmatprep.subr.mxu0 0.0
    %1429 = vmatpush1.msra.mxu0 0.0
    %1430 = vmatprep.subr.mxu0 0.0
    %1431 = vmatpush1.msra.mxu0 0.0
    %1432 = vmatprep.subr.mxu0 0.0
    %1433 = vmatpush1.msra.mxu0 0.0
    %1434 = vmatprep.subr.mxu0 0.0
    %1435 = vmatpush1.msra.mxu0 0.0
    %1436 = vmatprep.subr.mxu0 0.0
    %1437 = vmatpush1.msra.mxu0 0.0
    %1438 = vmatprep.subr.mxu0 0.0
    %1439 = vmatpush1.msra.mxu0 0.0
    %1440 = vmatprep.subr.mxu0 0.0
    %1441 = vmatpush1.msra.mxu0 0.0
    %1442 = vmatprep.subr.mxu0 0.0
    %1443 = vmatpush1.msra.mxu0 0.0
    %1444 = vmatprep.subr.mxu0 0.0
    %1445 = vmatpush1.msra.mxu0 0.0
    %1446 = vmatprep.subr.mxu0 0.0
    %1447 = vmatpush1.msra.mxu0 0.0
    %1448 = vmatprep.subr.mxu0 0.0
    %1449 = vmatpush1.msra.mxu0 0.0
    %1450 = vmatprep.subr.mxu0 0.0
    %1451 = vmatpush1.msra.mxu0 0.0
    %1452 = vmatprep.subr.mxu0 0.0
    %1453 = vmatpush1.msra.mxu0 0.0
    %1454 = vmatprep.mubr.f32.mxu0 0.0
    %1455 = vmatmul.mubr.f32.gmra.mrb[0].mxu0 %v1388
    %v1456 = vpop.f32.mrb[0].mxu0
    %v1457 = vadd.f32 %v1386, %v1456
    %v1458 = vpop.f32.mrb[0].mxu0
    %1459 = vdwg.mxu0
    %v1460 = vadd.f32 %v1457, %v1292
    %v1461 = vsel %vm266, %v1460, 0.0
    %1462 = vadd.xlane.f32.xlu0 %v1461
    %v1463 = vpop.xlane.xlu0 %1462
    %v1464 = vmul.f32 %v1463, %v1272
    %v1465 = vsub.f32 %v1460, %v1464
    %v1466 = vmul.f32 %v1465, %v1465
    %v1467 = vsel %vm266, %v1466, 0.0
    %1468 = vadd.xlane.f32.xlu0 %v1467
    %v1469 = vpop.xlane.xlu0 %1468
    %v1470 = vmul.f32 %v1469, %v1272
    %v1471 = vadd.f32 %v1470, 1e-05
    %v1472 = vrsqrt.pop %v1471
    %v1473 = vmul.f32 %v1465, %v1472
    %v1474 = vmul.f32 %v1473, %v1286
    %v1475 = vadd.f32 %v1474, %v1291
    %1476 = vmatprep.subr.mxu0 0.0
    %1477 = vmatpush1.msra.mxu0 %v1475
    %1478 = vmatprep.subr.mxu0 0.0
    %1479 = vmatpush1.msra.mxu0 0.0
    %1480 = vmatprep.subr.mxu0 0.0
    %1481 = vmatpush1.msra.mxu0 0.0
    %1482 = vmatprep.subr.mxu0 0.0
    %1483 = vmatpush1.msra.mxu0 0.0
    %1484 = vmatprep.subr.mxu0 0.0
    %1485 = vmatpush1.msra.mxu0 0.0
    %1486 = vmatprep.subr.mxu0 0.0
    %1487 = vmatpush1.msra.mxu0 0.0
    %1488 = vmatprep.subr.mxu0 0.0
    %1489 = vmatpush1.msra.mxu0 0.0
    %1490 = vmatprep.subr.mxu0 0.0
    %1491 = vmatpush1.msra.mxu0 0.0
    %1492 = vmatprep.subr.mxu0 0.0
    %1493 = vmatpush1.msra.mxu0 0.0
    %1494 = vmatprep.subr.mxu0 0.0
    %1495 = vmatpush1.msra.mxu0 0.0
    %1496 = vmatprep.subr.mxu0 0.0
    %1497 = vmatpush1.msra.mxu0 0.0
    %1498 = vmatprep.subr.mxu0 0.0
    %1499 = vmatpush1.msra.mxu0 0.0
    %1500 = vmatprep.subr.mxu0 0.0
    %1501 = vmatpush1.msra.mxu0 0.0
    %1502 = vmatprep.subr.mxu0 0.0
    %1503 = vmatpush1.msra.mxu0 0.0
    %1504 = vmatprep.subr.mxu0 0.0
    %1505 = vmatpush1.msra.mxu0 0.0
    %1506 = vmatprep.subr.mxu0 0.0
    %1507 = vmatpush1.msra.mxu0 0.0
    %1508 = vmatprep.subr.mxu0 0.0
    %1509 = vmatpush1.msra.mxu0 0.0
    %1510 = vmatprep.subr.mxu0 0.0
    %1511 = vmatpush1.msra.mxu0 0.0
    %1512 = vmatprep.subr.mxu0 0.0
    %1513 = vmatpush1.msra.mxu0 0.0
    %1514 = vmatprep.subr.mxu0 0.0
    %1515 = vmatpush1.msra.mxu0 0.0
    %1516 = vmatprep.subr.mxu0 0.0
    %1517 = vmatpush1.msra.mxu0 0.0
    %1518 = vmatprep.subr.mxu0 0.0
    %1519 = vmatpush1.msra.mxu0 0.0
    %1520 = vmatprep.subr.mxu0 0.0
    %1521 = vmatpush1.msra.mxu0 0.0
    %1522 = vmatprep.subr.mxu0 0.0
    %1523 = vmatpush1.msra.mxu0 0.0
    %1524 = vmatprep.subr.mxu0 0.0
    %1525 = vmatpush1.msra.mxu0 0.0
    %1526 = vmatprep.subr.mxu0 0.0
    %1527 = vmatpush1.msra.mxu0 0.0
    %1528 = vmatprep.subr.mxu0 0.0
    %1529 = vmatpush1.msra.mxu0 0.0
    %1530 = vmatprep.subr.mxu0 0.0
    %1531 = vmatpush1.msra.mxu0 0.0
    %1532 = vmatprep.subr.mxu0 0.0
    %1533 = vmatpush1.msra.mxu0 0.0
    %1534 = vmatprep.subr.mxu0 0.0
    %1535 = vmatpush1.msra.mxu0 0.0
    %1536 = vmatprep.subr.mxu0 0.0
    %1537 = vmatpush1.msra.mxu0 0.0
    %1538 = vmatprep.subr.mxu0 0.0
    %1539 = vmatpush1.msra.mxu0 0.0
    %1540 = vmatprep.mubr.f32.mxu0 0.0
    %1541 = vmatmul.mubr.f32.gmra.mrb[0].mxu0 %v452
    %v1542 = vpop.f32.mrb[0].mxu0
    %v1543 = vadd.f32 0.0, %v1542
    %v1544 = vpop.f32.mrb[0].mxu0
    %1545 = vdwg.mxu0
    %1547 = vrot.lane.b32.xlu0 %v1543, 32
    %v1548 = vpop.permute.xlu0 %1547
    %v1550 = vsel %vm266, %v524, %v1548
    %v1551 = vlaneseq
    %v1552 = vshrl.u32 %v1551, 7
    %v1553 = vsub.s32 0, %v1552
    %v1554 = vrot.slane %v169, %v1553
    %v1555 = vsub.f32 %v1550, %v1554
    %v1556 = vadd.f32 %v170, 1e-05
    %v1557 = vrsqrt.pop %v1556
    %v1558 = vlaneseq
    %v1559 = vshrl.u32 %v1558, 7
    %v1560 = vsub.s32 0, %v1559
    %v1561 = vrot.slane %v1557, %v1560
    %v1562 = vmul.f32 %v1555, %v1561
    %v1563 = vlaneseq
    %v1564 = vshrl.u32 %v1563, 7
    %v1565 = vsub.s32 0, %v1564
    %v1566 = vrot.slane %v167, %v1565
    %v1567 = vmul.f32 %v1562, %v1566
    %v1568 = vlaneseq
    %v1569 = vshrl.u32 %v1568, 7
    %v1570 = vsub.s32 0, %v1569
    %v1571 = vrot.slane %v168, %v1570
    %v1572 = vadd.f32 %v1567, %v1571
    %v1573 = vld [vmem:[#allocation13] sm:$0xff]
    %v1574 = vld [vmem:[#allocation13 + $0x8] sm:$0xff]
    %v1575 = vld [vmem:[#allocation13 + $0x10] sm:$0xff]
    %v1576 = vld [vmem:[#allocation13 + $0x18] sm:$0xff]
    %v1577 = vld [vmem:[#allocation13 + $0x20] sm:$0xff]
    %v1578 = vld [vmem:[#allocation13 + $0x28] sm:$0xff]
    %v1579 = vld [vmem:[#allocation13 + $0x30] sm:$0xff]
    %v1580 = vld [vmem:[#allocation13 + $0x38] sm:$0xff]
    %v1581 = vlaneseq
    %v1582 = vshrl.u32 %v1581, 7
    %v1583 = vsub.s32 0, %v1582
    %v1584 = vrot.slane %v171, %v1583
    %v1586 = vsel %vm183, %v1572, 0
    %1588 = vmatprep.subr.mxu0 0.0
    %1589 = vmatpush1.msra.mxu0 %v1573
    %1590 = vmatprep.subr.mxu0 0.0
    %1591 = vmatpush1.msra.mxu0 %v1574
    %1592 = vmatprep.subr.mxu0 0.0
    %1593 = vmatpush1.msra.mxu0 %v1575
    %1594 = vmatprep.subr.mxu0 0.0
    %1595 = vmatpush1.msra.mxu0 %v1576
    %1596 = vmatprep.subr.mxu0 0.0
    %1597 = vmatpush1.msra.mxu0 %v1577
    %1598 = vmatprep.subr.mxu0 0.0
    %1599 = vmatpush1.msra.mxu0 %v1578
    %1600 = vmatprep.subr.mxu0 0.0
    %1601 = vmatpush1.msra.mxu0 %v1579
    %1602 = vmatprep.subr.mxu0 0.0
    %1603 = vmatpush1.msra.mxu0 %v1580
    %1604 = vmatprep.subr.mxu0 0.0
    %1605 = vmatpush1.msra.mxu0 0.0
    %1606 = vmatprep.subr.mxu0 0.0
    %1607 = vmatpush1.msra.mxu0 0.0
    %1608 = vmatprep.subr.mxu0 0.0
    %1609 = vmatpush1.msra.mxu0 0.0
    %1610 = vmatprep.subr.mxu0 0.0
    %1611 = vmatpush1.msra.mxu0 0.0
    %1612 = vmatprep.subr.mxu0 0.0
    %1613 = vmatpush1.msra.mxu0 0.0
    %1614 = vmatprep.subr.mxu0 0.0
    %1615 = vmatpush1.msra.mxu0 0.0
    %1616 = vmatprep.subr.mxu0 0.0
    %1617 = vmatpush1.msra.mxu0 0.0
    %1618 = vmatprep.subr.mxu0 0.0
    %1619 = vmatpush1.msra.mxu0 0.0
    %1620 = vmatprep.subr.mxu0 0.0
    %1621 = vmatpush1.msra.mxu0 0.0
    %1622 = vmatprep.subr.mxu0 0.0
    %1623 = vmatpush1.msra.mxu0 0.0
    %1624 = vmatprep.subr.mxu0 0.0
    %1625 = vmatpush1.msra.mxu0 0.0
    %1626 = vmatprep.subr.mxu0 0.0
    %1627 = vmatpush1.msra.mxu0 0.0
    %1628 = vmatprep.subr.mxu0 0.0
    %1629 = vmatpush1.msra.mxu0 0.0
    %1630 = vmatprep.subr.mxu0 0.0
    %1631 = vmatpush1.msra.mxu0 0.0
    %1632 = vmatprep.subr.mxu0 0.0
    %1633 = vmatpush1.msra.mxu0 0.0
    %1634 = vmatprep.subr.mxu0 0.0
    %1635 = vmatpush1.msra.mxu0 0.0
    %1636 = vmatprep.subr.mxu0 0.0
    %1637 = vmatpush1.msra.mxu0 0.0
    %1638 = vmatprep.subr.mxu0 0.0
    %1639 = vmatpush1.msra.mxu0 0.0
    %1640 = vmatprep.subr.mxu0 0.0
    %1641 = vmatpush1.msra.mxu0 0.0
    %1642 = vmatprep.subr.mxu0 0.0
    %1643 = vmatpush1.msra.mxu0 0.0
    %1644 = vmatprep.subr.mxu0 0.0
    %1645 = vmatpush1.msra.mxu0 0.0
    %1646 = vmatprep.subr.mxu0 0.0
    %1647 = vmatpush1.msra.mxu0 0.0
    %1648 = vmatprep.subr.mxu0 0.0
    %1649 = vmatpush1.msra.mxu0 0.0
    %1650 = vmatprep.subr.mxu0 0.0
    %1651 = vmatpush1.msra.mxu0 0.0
    %1652 = vmatprep.mubr.f32.mxu0 0.0
    %1653 = vmatmul.mubr.f32.gmra.mrb[0].mxu0 %v1586
    %v1654 = vpop.f32.mrb[0].mxu0
    %v1655 = vadd.f32 %v1584, %v1654
    %v1656 = vpop.f32.mrb[0].mxu0
    %1657 = vdwg.mxu0
    %v1658 = vmax.f32 %v1655, 0.0
    %v1659 = vld [vmem:[%s15] sm:$0xff]
    %v1660 = vld [vmem:[%s15 + $0x8] sm:$0xff]
    %v1661 = vld [vmem:[%s15 + $0x10] sm:$0xff]
    %v1662 = vld [vmem:[%s15 + $0x18] sm:$0xff]
    %v1663 = vld [vmem:[%s15 + $0x20] sm:$0xff]
    %v1664 = vld [vmem:[%s15 + $0x28] sm:$0xff]
    %v1665 = vld [vmem:[%s15 + $0x30] sm:$0xff]
    %v1666 = vld [vmem:[%s15 + $0x38] sm:$0xff]
    %v1667 = vld [vmem:[%s15 + $0x40] sm:$0xff]
    %v1668 = vld [vmem:[%s15 + $0x48] sm:$0xff]
    %v1669 = vld [vmem:[%s15 + $0x50] sm:$0xff]
    %v1670 = vld [vmem:[%s15 + $0x58] sm:$0xff]
    %v1671 = vld [vmem:[%s15 + $0x60] sm:$0xff]
    %v1672 = vld [vmem:[%s15 + $0x68] sm:$0xff]
    %v1673 = vld [vmem:[%s15 + $0x70] sm:$0xff]
    %v1674 = vld [vmem:[%s15 + $0x78] sm:$0xff]
    %v1675 = vlaneseq
    %v1676 = vshrl.u32 %v1675, 7
    %v1677 = vsub.s32 0, %v1676
    %v1678 = vrot.slane %v172, %v1677
    %1679 = vmatprep.subr.mxu0 0.0
    %1680 = vmatpush1.msra.mxu0 %v1659
    %1681 = vmatprep.subr.mxu0 0.0
    %1682 = vmatpush1.msra.mxu0 %v1660
    %1683 = vmatprep.subr.mxu0 0.0
    %1684 = vmatpush1.msra.mxu0 %v1661
    %1685 = vmatprep.subr.mxu0 0.0
    %1686 = vmatpush1.msra.mxu0 %v1662
    %1687 = vmatprep.subr.mxu0 0.0
    %1688 = vmatpush1.msra.mxu0 %v1663
    %1689 = vmatprep.subr.mxu0 0.0
    %1690 = vmatpush1.msra.mxu0 %v1664
    %1691 = vmatprep.subr.mxu0 0.0
    %1692 = vmatpush1.msra.mxu0 %v1665
    %1693 = vmatprep.subr.mxu0 0.0
    %1694 = vmatpush1.msra.mxu0 %v1666
    %1695 = vmatprep.subr.mxu0 0.0
    %1696 = vmatpush1.msra.mxu0 %v1667
    %1697 = vmatprep.subr.mxu0 0.0
    %1698 = vmatpush1.msra.mxu0 %v1668
    %1699 = vmatprep.subr.mxu0 0.0
    %1700 = vmatpush1.msra.mxu0 %v1669
    %1701 = vmatprep.subr.mxu0 0.0
    %1702 = vmatpush1.msra.mxu0 %v1670
    %1703 = vmatprep.subr.mxu0 0.0
    %1704 = vmatpush1.msra.mxu0 %v1671
    %1705 = vmatprep.subr.mxu0 0.0
    %1706 = vmatpush1.msra.mxu0 %v1672
    %1707 = vmatprep.subr.mxu0 0.0
    %1708 = vmatpush1.msra.mxu0 %v1673
    %1709 = vmatprep.subr.mxu0 0.0
    %1710 = vmatpush1.msra.mxu0 %v1674
    %1711 = vmatprep.subr.mxu0 0.0
    %1712 = vmatpush1.msra.mxu0 0.0
    %1713 = vmatprep.subr.mxu0 0.0
    %1714 = vmatpush1.msra.mxu0 0.0
    %1715 = vmatprep.subr.mxu0 0.0
    %1716 = vmatpush1.msra.mxu0 0.0
    %1717 = vmatprep.subr.mxu0 0.0
    %1718 = vmatpush1.msra.mxu0 0.0
    %1719 = vmatprep.subr.mxu0 0.0
    %1720 = vmatpush1.msra.mxu0 0.0
    %1721 = vmatprep.subr.mxu0 0.0
    %1722 = vmatpush1.msra.mxu0 0.0
    %1723 = vmatprep.subr.mxu0 0.0
    %1724 = vmatpush1.msra.mxu0 0.0
    %1725 = vmatprep.subr.mxu0 0.0
    %1726 = vmatpush1.msra.mxu0 0.0
    %1727 = vmatprep.subr.mxu0 0.0
    %1728 = vmatpush1.msra.mxu0 0.0
    %1729 = vmatprep.subr.mxu0 0.0
    %1730 = vmatpush1.msra.mxu0 0.0
    %1731 = vmatprep.subr.mxu0 0.0
    %1732 = vmatpush1.msra.mxu0 0.0
    %1733 = vmatprep.subr.mxu0 0.0
    %1734 = vmatpush1.msra.mxu0 0.0
    %1735 = vmatprep.subr.mxu0 0.0
    %1736 = vmatpush1.msra.mxu0 0.0
    %1737 = vmatprep.subr.mxu0 0.0
    %1738 = vmatpush1.msra.mxu0 0.0
    %1739 = vmatprep.subr.mxu0 0.0
    %1740 = vmatpush1.msra.mxu0 0.0
    %1741 = vmatprep.subr.mxu0 0.0
    %1742 = vmatpush1.msra.mxu0 0.0
    %1743 = vmatprep.mubr.f32.mxu0 0.0
    %1744 = vmatmul.mubr.f32.gmra.mrb[0].mxu0 %v1658
    %v1745 = vpop.f32.mrb[0].mxu0
    %v1746 = vadd.f32 %v1678, %v1745
    %v1747 = vpop.f32.mrb[0].mxu0
    %1748 = vdwg.mxu0
    %v1749 = vmax.f32 %v1746, 0.0
    %v1750 = vld [vmem:[%s16] sm:$0xff]
    %v1751 = vld [vmem:[%s16 + $0x8] sm:$0xff]
    %v1752 = vld [vmem:[%s16 + $0x10] sm:$0xff]
    %v1753 = vld [vmem:[%s16 + $0x18] sm:$0xff]
    %v1754 = vld [vmem:[%s16 + $0x20] sm:$0xff]
    %v1755 = vld [vmem:[%s16 + $0x28] sm:$0xff]
    %v1756 = vld [vmem:[%s16 + $0x30] sm:$0xff]
    %v1757 = vld [vmem:[%s16 + $0x38] sm:$0xff]
    %v1758 = vld [vmem:[%s16 + $0x40] sm:$0xff]
    %v1759 = vld [vmem:[%s16 + $0x48] sm:$0xff]
    %v1760 = vld [vmem:[%s16 + $0x50] sm:$0xff]
    %v1761 = vld [vmem:[%s16 + $0x58] sm:$0xff]
    %v1762 = vld [vmem:[%s16 + $0x60] sm:$0xff]
    %v1763 = vld [vmem:[%s16 + $0x68] sm:$0xff]
    %v1764 = vld [vmem:[%s16 + $0x70] sm:$0xff]
    %v1765 = vld [vmem:[%s16 + $0x78] sm:$0xff]
    %v1766 = vlaneseq
    %v1767 = vshrl.u32 %v1766, 7
    %v1768 = vsub.s32 0, %v1767
    %v1769 = vrot.slane %v173, %v1768
    %1770 = vmatprep.subr.mxu0 0.0
    %1771 = vmatpush1.msra.mxu0 %v1750
    %1772 = vmatprep.subr.mxu0 0.0
    %1773 = vmatpush1.msra.mxu0 %v1751
    %1774 = vmatprep.subr.mxu0 0.0
    %1775 = vmatpush1.msra.mxu0 %v1752
    %1776 = vmatprep.subr.mxu0 0.0
    %1777 = vmatpush1.msra.mxu0 %v1753
    %1778 = vmatprep.subr.mxu0 0.0
    %1779 = vmatpush1.msra.mxu0 %v1754
    %1780 = vmatprep.subr.mxu0 0.0
    %1781 = vmatpush1.msra.mxu0 %v1755
    %1782 = vmatprep.subr.mxu0 0.0
    %1783 = vmatpush1.msra.mxu0 %v1756
    %1784 = vmatprep.subr.mxu0 0.0
    %1785 = vmatpush1.msra.mxu0 %v1757
    %1786 = vmatprep.subr.mxu0 0.0
    %1787 = vmatpush1.msra.mxu0 %v1758
    %1788 = vmatprep.subr.mxu0 0.0
    %1789 = vmatpush1.msra.mxu0 %v1759
    %1790 = vmatprep.subr.mxu0 0.0
    %1791 = vmatpush1.msra.mxu0 %v1760
    %1792 = vmatprep.subr.mxu0 0.0
    %1793 = vmatpush1.msra.mxu0 %v1761
    %1794 = vmatprep.subr.mxu0 0.0
    %1795 = vmatpush1.msra.mxu0 %v1762
    %1796 = vmatprep.subr.mxu0 0.0
    %1797 = vmatpush1.msra.mxu0 %v1763
    %1798 = vmatprep.subr.mxu0 0.0
    %1799 = vmatpush1.msra.mxu0 %v1764
    %1800 = vmatprep.subr.mxu0 0.0
    %1801 = vmatpush1.msra.mxu0 %v1765
    %1802 = vmatprep.subr.mxu0 0.0
    %1803 = vmatpush1.msra.mxu0 0.0
    %1804 = vmatprep.subr.mxu0 0.0
    %1805 = vmatpush1.msra.mxu0 0.0
    %1806 = vmatprep.subr.mxu0 0.0
    %1807 = vmatpush1.msra.mxu0 0.0
    %1808 = vmatprep.subr.mxu0 0.0
    %1809 = vmatpush1.msra.mxu0 0.0
    %1810 = vmatprep.subr.mxu0 0.0
    %1811 = vmatpush1.msra.mxu0 0.0
    %1812 = vmatprep.subr.mxu0 0.0
    %1813 = vmatpush1.msra.mxu0 0.0
    %1814 = vmatprep.subr.mxu0 0.0
    %1815 = vmatpush1.msra.mxu0 0.0
    %1816 = vmatprep.subr.mxu0 0.0
    %1817 = vmatpush1.msra.mxu0 0.0
    %1818 = vmatprep.subr.mxu0 0.0
    %1819 = vmatpush1.msra.mxu0 0.0
    %1820 = vmatprep.subr.mxu0 0.0
    %1821 = vmatpush1.msra.mxu0 0.0
    %1822 = vmatprep.subr.mxu0 0.0
    %1823 = vmatpush1.msra.mxu0 0.0
    %1824 = vmatprep.subr.mxu0 0.0
    %1825 = vmatpush1.msra.mxu0 0.0
    %1826 = vmatprep.subr.mxu0 0.0
    %1827 = vmatpush1.msra.mxu0 0.0
    %1828 = vmatprep.subr.mxu0 0.0
    %1829 = vmatpush1.msra.mxu0 0.0
    %1830 = vmatprep.subr.mxu0 0.0
    %1831 = vmatpush1.msra.mxu0 0.0
    %1832 = vmatprep.subr.mxu0 0.0
    %1833 = vmatpush1.msra.mxu0 0.0
    %1834 = vmatprep.mubr.f32.mxu0 0.0
    %1835 = vmatmul.mubr.f32.gmra.mrb[0].mxu0 %v1749
    %v1836 = vpop.f32.mrb[0].mxu0
    %v1837 = vadd.f32 %v1769, %v1836
    %v1838 = vpop.f32.mrb[0].mxu0
    %1839 = vdwg.mxu0
    %1840 = vst [vmem:[#allocation14] sm:$0x3] %v1837
    // Predicated region
    $region98: #{combine_inter_model_forward.1} parent=1 // pred_check
      _
    $region99: #{combine_inter_model_forward.1} parent=1 // pred_check_branch
      %1842 = sbr.rel (0) target = $region101
    $region100: #{combine_inter_model_forward.1} parent=1 // pred_region
      %s1844 = ssub.s32 32, 32
      %1845 = vsyncadd [#allocation4], %s1844
      %s1847 = sshll.u32 [#allocation14], 4
      %s1848 = int_to_ptr.vmem [resolvable:$true] %s1847
      %1850 = dma.vmem_to_hbm [thread:$0]  %s1848, 32, %s17, [#allocation4]
    $region101: #{combine_inter_model_forward.1} parent=1 // pred_fallthru
      _
    // Predicated region
    $region102: #{combine_inter_model_forward.1} parent=1 // pred_check
      _
    $region103: #{combine_inter_model_forward.1} parent=1 // pred_check_branch
      %1852 = sbr.rel (0) target = $region105
    $region104: #{combine_inter_model_forward.1} parent=1 // pred_region
      %1853 = dma.done [#allocation4], 32
    $region105: #{combine_inter_model_forward.1} parent=1 // pred_fallthru
      _
    %1854 = vsyncpa [#allocation3], 1
    %1855 = vsyncpa [#allocation6], 1
    %1856 = vsyncpa [#allocation9], 1
    %1857 = vsyncpa [#allocation12], 1
    %1858 = vsyncpa [#allocation4], 1

</llo_original>
